<compile_context>
chip_gen: v5e
topology: v5e:2x2
jax: 0.10.0
libtpu: 0.0.40
codegen_flags: <defaults>
</compile_context>

<pallas_src>
import functools

import jax
import jax.numpy as jnp
from jax.experimental import pallas as pl
from jax.experimental.pallas import tpu as pltpu


# -----------------------------------------------------------------------------
# Fused kernel: one (n*s, d) slab per grid step (= one batch sample)
# -----------------------------------------------------------------------------
def _fused_block_kernel(
    x_ref,
    # intra attention (PreNorm + MHA + out proj)
    g1_ref, be1_ref, wq1_ref, wk1_ref, wv1_ref, wo1_ref, bo1_ref,
    # cross attention (PreNorm + MHA + out proj)
    g2_ref, be2_ref, wq2_ref, wk2_ref, wv2_ref, wo2_ref, bo2_ref,
    # feed-forward
    w1_ref, b1_ref, w2_ref, b2_ref,
    # additive attention masks over the flattened (n*s) axis
    mi_ref, mc_ref,
    o_ref,
    *, heads, head_dim, eps):

    x = x_ref[0].astype(jnp.float32)                        # (M, d), M = n*s
    scale = head_dim ** (-0.5)
    inv_sqrt2 = 0.7071067811865476

    def prenorm_attn(xin, gamma, beta, wq_ref, wk_ref, wv_ref, wo_ref, bo, mask):
        # LayerNorm over last dim (biased variance, eps, affine) == nn.LayerNorm
        mu = jnp.mean(xin, axis=-1, keepdims=True)
        var = jnp.mean((xin - mu) ** 2, axis=-1, keepdims=True)
        xn = (xin - mu) * jax.lax.rsqrt(var + eps)
        xn = xn * gamma + beta                              # (M, d)

        # residual + output-projection bias folded into the accumulator
        acc = xin + bo                                      # (M, d)
        for h in range(heads):                              # static, tiny
            q = jnp.dot(xn, wq_ref[h], preferred_element_type=jnp.float32)  # (M, hd)
            k = jnp.dot(xn, wk_ref[h], preferred_element_type=jnp.float32)  # (M, hd)
            v = jnp.dot(xn, wv_ref[h], preferred_element_type=jnp.float32)  # (M, hd)
            dots = jnp.dot(q, k.T, preferred_element_type=jnp.float32) * scale + mask
            dots = dots - jnp.max(dots, axis=-1, keepdims=True)
            p = jnp.exp(dots)
            attn = p * pl.reciprocal(jnp.sum(p, axis=-1, keepdims=True), approx=True)
            oh = jnp.dot(attn, v, preferred_element_type=jnp.float32)        # (M, hd)
            acc = acc + jnp.dot(oh, wo_ref[h], preferred_element_type=jnp.float32)
        return acc                                          # attn_out + bias + residual

    # intra attention (attend over s within each n) + residual
    x = prenorm_attn(x, g1_ref[...], be1_ref[...],
                     wq1_ref, wk1_ref, wv1_ref, wo1_ref, bo1_ref[...], mi_ref[...])
    # cross attention (attend over n within each s) + residual
    x = prenorm_attn(x, g2_ref[...], be2_ref[...],
                     wq2_ref, wk2_ref, wv2_ref, wo2_ref, bo2_ref[...], mc_ref[...])

    # feed-forward (Linear -> exact GELU -> Linear) + residual
    h = jnp.dot(x, w1_ref[...], preferred_element_type=jnp.float32) + b1_ref[...]
    h = 0.5 * h * (1.0 + jax.lax.erf(h * inv_sqrt2))
    y = jnp.dot(h, w2_ref[...], preferred_element_type=jnp.float32) + b2_ref[...]
    o_ref[0] = (y + x).astype(o_ref.dtype)


# -----------------------------------------------------------------------------
# Wrapper: full CrossIntraEncoderBlock forward
# -----------------------------------------------------------------------------
def _full_spec(shape):
    return pl.BlockSpec(shape, lambda i: tuple(0 for _ in shape))


def cross_intra_encoder_block(x, params, *, heads, head_dim):
    """x: (b, n, s, d) float32 -> (b, n, s, d); semantics of CrossIntraEncoderBlock."""
    b, n, s, d = x.shape
    M = n * s
    inner = heads * head_dim
    xf = x.reshape(b, M, d)                                 # free, contiguous

    # Additive masks over the flattened row index r = i_n * s + i_s:
    #   intra: rows may attend iff same n  (r // s equal)
    #   cross: rows may attend iff same s  (r %  s equal)
    rid = jnp.arange(M, dtype=jnp.int32)
    neg = jnp.float32(-1e30)
    m_intra = jnp.where((rid[:, None] // s) == (rid[None, :] // s), 0.0, neg).astype(jnp.float32)
    m_cross = jnp.where((rid[:, None] % s) == (rid[None, :] % s), 0.0, neg).astype(jnp.float32)

    def split_attn(p):
        # Wqkv^T: (d, 3*inner) -> per-head stacks; Wout^T: (inner, d) -> per-head stack.
        wqkv = p["wqkv_t"]
        wq = wqkv[:, 0 * inner:1 * inner].reshape(d, heads, head_dim).transpose(1, 0, 2)
        wk = wqkv[:, 1 * inner:2 * inner].reshape(d, heads, head_dim).transpose(1, 0, 2)
        wv = wqkv[:, 2 * inner:3 * inner].reshape(d, heads, head_dim).transpose(1, 0, 2)
        wo = p["wout_t"].reshape(heads, head_dim, d)
        return (p["gamma"], p["beta"], wq, wk, wv, wo, p["bout"])

    intra = split_attn(params["intra"])
    cross = split_attn(params["cross"])
    mlp = params["mlp"]
    hidden = mlp["w1_t"].shape[1]

    kernel = functools.partial(_fused_block_kernel, heads=heads,
                               head_dim=head_dim, eps=1e-5)

    attn_specs = [
        _full_spec((1, d)), _full_spec((1, d)),
        _full_spec((heads, d, head_dim)), _full_spec((heads, d, head_dim)),
        _full_spec((heads, d, head_dim)), _full_spec((heads, head_dim, d)),
        _full_spec((1, d)),
    ]

    out = pl.pallas_call(
        kernel,
        out_shape=jax.ShapeDtypeStruct((b, M, d), x.dtype),
        grid=(b,),
        in_specs=(
            [pl.BlockSpec((1, M, d), lambda i: (i, 0, 0))]
            + attn_specs + attn_specs
            + [_full_spec((d, hidden)), _full_spec((1, hidden)),
               _full_spec((hidden, d)), _full_spec((1, d)),
               _full_spec((M, M)), _full_spec((M, M))]
        ),
        out_specs=pl.BlockSpec((1, M, d), lambda i: (i, 0, 0)),
        compiler_params=pltpu.CompilerParams(dimension_semantics=("parallel",)),
    )(xf,
      *intra,
      *cross,
      mlp["w1_t"], mlp["b1"], mlp["w2_t"], mlp["b2"],
      m_intra, m_cross)

    return out.reshape(b, n, s, d)


# -----------------------------------------------------------------------------
# Deterministic parameter construction (synthetic, no checkpoint)
# -----------------------------------------------------------------------------
def init_params(key, dim, heads, head_dim, hidden_dim):
    inner = heads * head_dim
    ks = jax.random.split(key, 12)

    def nrm(k, shape, scale=0.02):
        return (scale * jax.random.normal(k, shape)).astype(jnp.float32)

    def attn_params(k0, k1, k2, k3):
        return {
            "gamma": jnp.ones((1, dim), jnp.float32) + nrm(k0, (1, dim)),
            "beta": nrm(k1, (1, dim)),
            "wqkv_t": nrm(k2, (dim, 3 * inner)),
            "wout_t": nrm(k3, (inner, dim)),
            "bout": jnp.zeros((1, dim), jnp.float32),
        }

    return {
        "intra": attn_params(ks[0], ks[1], ks[2], ks[3]),
        "cross": attn_params(ks[4], ks[5], ks[6], ks[7]),
        "mlp": {
            "w1_t": nrm(ks[8], (dim, hidden_dim)),
            "b1": nrm(ks[9], (1, hidden_dim)),
            "w2_t": nrm(ks[10], (hidden_dim, dim)),
            "b2": nrm(ks[11], (1, dim)),
        },
    }


if __name__ == "__main__":
    # Small shapes consistent with the module: x is (b, n, s, d).
    b, n, s, d = 2, 4, 8, 32
    heads, head_dim, hidden_dim = 2, 16, 64

    key = jax.random.PRNGKey(0)
    kx, kp = jax.random.split(key)
    x = jax.random.normal(kx, (b, n, s, d), dtype=jnp.float32)
    params = init_params(kp, d, heads, head_dim, hidden_dim)

    fwd = jax.jit(functools.partial(cross_intra_encoder_block,
                                    heads=heads, head_dim=head_dim))
    out = fwd(x, params)
    jax.block_until_ready(out)
    assert out.shape == (b, n, s, d) and out.dtype == jnp.float32
    print("KERNEL_OK")
</pallas_src>

<mosaic_0001>
module attributes {stable_mosaic.version = 11 : i64} {
  func.func @_fused_block_kernel(%arg0: i32, %arg1: memref<1x32x32xf32, #tpu.memory_space<vmem>>, %arg2: memref<1x32xf32, #tpu.memory_space<vmem>>, %arg3: memref<1x32xf32, #tpu.memory_space<vmem>>, %arg4: memref<2x32x16xf32, #tpu.memory_space<vmem>>, %arg5: memref<2x32x16xf32, #tpu.memory_space<vmem>>, %arg6: memref<2x32x16xf32, #tpu.memory_space<vmem>>, %arg7: memref<2x16x32xf32, #tpu.memory_space<vmem>>, %arg8: memref<1x32xf32, #tpu.memory_space<vmem>>, %arg9: memref<1x32xf32, #tpu.memory_space<vmem>>, %arg10: memref<1x32xf32, #tpu.memory_space<vmem>>, %arg11: memref<2x32x16xf32, #tpu.memory_space<vmem>>, %arg12: memref<2x32x16xf32, #tpu.memory_space<vmem>>, %arg13: memref<2x32x16xf32, #tpu.memory_space<vmem>>, %arg14: memref<2x16x32xf32, #tpu.memory_space<vmem>>, %arg15: memref<1x32xf32, #tpu.memory_space<vmem>>, %arg16: memref<32x64xf32, #tpu.memory_space<vmem>>, %arg17: memref<1x64xf32, #tpu.memory_space<vmem>>, %arg18: memref<64x32xf32, #tpu.memory_space<vmem>>, %arg19: memref<1x32xf32, #tpu.memory_space<vmem>>, %arg20: memref<32x32xf32, #tpu.memory_space<vmem>>, %arg21: memref<32x32xf32, #tpu.memory_space<vmem>>, %arg22: memref<1x32x32xf32, #tpu.memory_space<vmem>>) attributes {dimension_semantics = [#tpu.dimension_semantics<parallel>], iteration_bounds = array<i64: 2>, scalar_prefetch = 0 : i64, scratch_operands = 0 : i64, tpu.core_type = #tpu.core_type<tc>, window_params = [{transform_indices = @transform_0, window_bounds = array<i64: 1, 32, 32>}, {pipeline_mode = #tpu.pipeline_mode<synchronous>, transform_indices = @transform_1, window_bounds = array<i64: 1, 32>}, {pipeline_mode = #tpu.pipeline_mode<synchronous>, transform_indices = @transform_2, window_bounds = array<i64: 1, 32>}, {pipeline_mode = #tpu.pipeline_mode<synchronous>, transform_indices = @transform_3, window_bounds = array<i64: 2, 32, 16>}, {pipeline_mode = #tpu.pipeline_mode<synchronous>, transform_indices = @transform_4, window_bounds = array<i64: 2, 32, 16>}, {pipeline_mode = #tpu.pipeline_mode<synchronous>, transform_indices = @transform_5, window_bounds = array<i64: 2, 32, 16>}, {pipeline_mode = #tpu.pipeline_mode<synchronous>, transform_indices = @transform_6, window_bounds = array<i64: 2, 16, 32>}, {pipeline_mode = #tpu.pipeline_mode<synchronous>, transform_indices = @transform_7, window_bounds = array<i64: 1, 32>}, {pipeline_mode = #tpu.pipeline_mode<synchronous>, transform_indices = @transform_8, window_bounds = array<i64: 1, 32>}, {pipeline_mode = #tpu.pipeline_mode<synchronous>, transform_indices = @transform_9, window_bounds = array<i64: 1, 32>}, {pipeline_mode = #tpu.pipeline_mode<synchronous>, transform_indices = @transform_10, window_bounds = array<i64: 2, 32, 16>}, {pipeline_mode = #tpu.pipeline_mode<synchronous>, transform_indices = @transform_11, window_bounds = array<i64: 2, 32, 16>}, {pipeline_mode = #tpu.pipeline_mode<synchronous>, transform_indices = @transform_12, window_bounds = array<i64: 2, 32, 16>}, {pipeline_mode = #tpu.pipeline_mode<synchronous>, transform_indices = @transform_13, window_bounds = array<i64: 2, 16, 32>}, {pipeline_mode = #tpu.pipeline_mode<synchronous>, transform_indices = @transform_14, window_bounds = array<i64: 1, 32>}, {pipeline_mode = #tpu.pipeline_mode<synchronous>, transform_indices = @transform_15, window_bounds = array<i64: 32, 64>}, {pipeline_mode = #tpu.pipeline_mode<synchronous>, transform_indices = @transform_16, window_bounds = array<i64: 1, 64>}, {pipeline_mode = #tpu.pipeline_mode<synchronous>, transform_indices = @transform_17, window_bounds = array<i64: 64, 32>}, {pipeline_mode = #tpu.pipeline_mode<synchronous>, transform_indices = @transform_18, window_bounds = array<i64: 1, 32>}, {pipeline_mode = #tpu.pipeline_mode<synchronous>, transform_indices = @transform_19, window_bounds = array<i64: 32, 32>}, {pipeline_mode = #tpu.pipeline_mode<synchronous>, transform_indices = @transform_20, window_bounds = array<i64: 32, 32>}, {transform_indices = @transform_21, window_bounds = array<i64: 1, 32, 32>}]} {
    %c0 = arith.constant 0 : index
    %c0_0 = arith.constant 0 : index
    %c0_1 = arith.constant 0 : index
    %0 = vector.load %arg1[%c0, %c0_0, %c0_1] : memref<1x32x32xf32, #tpu.memory_space<vmem>>, vector<1x32x32xf32>
    %1 = vector.shape_cast %0 : vector<1x32x32xf32> to vector<32x32xf32>
    %c0_2 = arith.constant 0 : index
    %c0_3 = arith.constant 0 : index
    %2 = vector.load %arg2[%c0_2, %c0_3] : memref<1x32xf32, #tpu.memory_space<vmem>>, vector<1x32xf32>
    %c0_4 = arith.constant 0 : index
    %c0_5 = arith.constant 0 : index
    %3 = vector.load %arg3[%c0_4, %c0_5] : memref<1x32xf32, #tpu.memory_space<vmem>>, vector<1x32xf32>
    %c0_6 = arith.constant 0 : index
    %c0_7 = arith.constant 0 : index
    %4 = vector.load %arg8[%c0_6, %c0_7] : memref<1x32xf32, #tpu.memory_space<vmem>>, vector<1x32xf32>
    %c0_8 = arith.constant 0 : index
    %c0_9 = arith.constant 0 : index
    %5 = vector.load %arg20[%c0_8, %c0_9] : memref<32x32xf32, #tpu.memory_space<vmem>>, vector<32x32xf32>
    %cst = arith.constant dense<0.000000e+00> : vector<32xf32>
    %6 = vector.multi_reduction <add>, %1, %cst [1] : vector<32x32xf32> to vector<32xf32>
    %7 = vector.shape_cast %6 : vector<32xf32> to vector<32x1xf32>
    %cst_10 = arith.constant 3.200000e+01 : f32
    %8 = vector.broadcast %cst_10 : f32 to vector<32x1xf32>
    %9 = arith.divf %7, %8 : vector<32x1xf32>
    %10 = vector.broadcast %9 : vector<32x1xf32> to vector<32x32xf32>
    %11 = arith.subf %1, %10 : vector<32x32xf32>
    %12 = arith.mulf %11, %11 : vector<32x32xf32>
    %cst_11 = arith.constant dense<0.000000e+00> : vector<32xf32>
    %13 = vector.multi_reduction <add>, %12, %cst_11 [1] : vector<32x32xf32> to vector<32xf32>
    %14 = vector.shape_cast %13 : vector<32xf32> to vector<32x1xf32>
    %cst_12 = arith.constant 3.200000e+01 : f32
    %15 = vector.broadcast %cst_12 : f32 to vector<32x1xf32>
    %16 = arith.divf %14, %15 : vector<32x1xf32>
    %17 = vector.broadcast %9 : vector<32x1xf32> to vector<32x32xf32>
    %18 = arith.subf %1, %17 : vector<32x32xf32>
    %cst_13 = arith.constant 9.99999974E-6 : f32
    %19 = vector.broadcast %cst_13 : f32 to vector<32x1xf32>
    %20 = arith.addf %16, %19 : vector<32x1xf32>
    %21 = math.rsqrt %20 : vector<32x1xf32>
    %22 = vector.broadcast %21 : vector<32x1xf32> to vector<32x32xf32>
    %23 = arith.mulf %18, %22 : vector<32x32xf32>
    %24 = vector.broadcast %2 : vector<1x32xf32> to vector<32x32xf32>
    %25 = arith.mulf %23, %24 : vector<32x32xf32>
    %26 = vector.broadcast %3 : vector<1x32xf32> to vector<32x32xf32>
    %27 = arith.addf %25, %26 : vector<32x32xf32>
    %28 = vector.broadcast %4 : vector<1x32xf32> to vector<32x32xf32>
    %29 = arith.addf %1, %28 : vector<32x32xf32>
    %c0_14 = arith.constant 0 : index
    %c0_15 = arith.constant 0 : index
    %c0_16 = arith.constant 0 : index
    %30 = vector.load %arg4[%c0_14, %c0_15, %c0_16] : memref<2x32x16xf32, #tpu.memory_space<vmem>>, vector<1x32x16xf32>
    %31 = vector.shape_cast %30 : vector<1x32x16xf32> to vector<32x16xf32>
    %cst_17 = arith.constant dense<0.000000e+00> : vector<32x16xf32>
    %32 = tpu.matmul %27, %31, %cst_17 {dimension_numbers = #tpu.dot_dimension_numbers<[1], [0], [0], [1], [0, 0, 1, 1], [], []>} : vector<32x32xf32>, vector<32x16xf32>, vector<32x16xf32> -> vector<32x16xf32>
    %c0_18 = arith.constant 0 : index
    %c0_19 = arith.constant 0 : index
    %c0_20 = arith.constant 0 : index
    %33 = vector.load %arg5[%c0_18, %c0_19, %c0_20] : memref<2x32x16xf32, #tpu.memory_space<vmem>>, vector<1x32x16xf32>
    %34 = vector.shape_cast %33 : vector<1x32x16xf32> to vector<32x16xf32>
    %cst_21 = arith.constant dense<0.000000e+00> : vector<32x16xf32>
    %35 = tpu.matmul %27, %34, %cst_21 {dimension_numbers = #tpu.dot_dimension_numbers<[1], [0], [0], [1], [0, 0, 1, 1], [], []>} : vector<32x32xf32>, vector<32x16xf32>, vector<32x16xf32> -> vector<32x16xf32>
    %c0_22 = arith.constant 0 : index
    %c0_23 = arith.constant 0 : index
    %c0_24 = arith.constant 0 : index
    %36 = vector.load %arg6[%c0_22, %c0_23, %c0_24] : memref<2x32x16xf32, #tpu.memory_space<vmem>>, vector<1x32x16xf32>
    %37 = vector.shape_cast %36 : vector<1x32x16xf32> to vector<32x16xf32>
    %cst_25 = arith.constant dense<0.000000e+00> : vector<32x16xf32>
    %38 = tpu.matmul %27, %37, %cst_25 {dimension_numbers = #tpu.dot_dimension_numbers<[1], [0], [0], [1], [0, 0, 1, 1], [], []>} : vector<32x32xf32>, vector<32x16xf32>, vector<32x16xf32> -> vector<32x16xf32>
    %39 = tpu.transpose %35, [1, 0] : vector<32x16xf32> -> vector<16x32xf32>
    %cst_26 = arith.constant dense<0.000000e+00> : vector<32x32xf32>
    %40 = tpu.matmul %32, %39, %cst_26 {dimension_numbers = #tpu.dot_dimension_numbers<[1], [0], [0], [1], [0, 0, 1, 1], [], []>} : vector<32x16xf32>, vector<16x32xf32>, vector<32x32xf32> -> vector<32x32xf32>
    %cst_27 = arith.constant 2.500000e-01 : f32
    %41 = vector.broadcast %cst_27 : f32 to vector<32x32xf32>
    %42 = arith.mulf %40, %41 : vector<32x32xf32>
    %43 = arith.addf %42, %5 : vector<32x32xf32>
    %cst_28 = arith.constant dense<0xFF800000> : vector<32xf32>
    %44 = vector.multi_reduction <maximumf>, %43, %cst_28 [1] : vector<32x32xf32> to vector<32xf32>
    %45 = vector.shape_cast %44 : vector<32xf32> to vector<32x1xf32>
    %46 = vector.broadcast %45 : vector<32x1xf32> to vector<32x32xf32>
    %47 = arith.subf %43, %46 : vector<32x32xf32>
    %48 = math.exp %47 : vector<32x32xf32>
    %cst_29 = arith.constant dense<0.000000e+00> : vector<32xf32>
    %49 = vector.multi_reduction <add>, %48, %cst_29 [1] : vector<32x32xf32> to vector<32xf32>
    %50 = vector.shape_cast %49 : vector<32xf32> to vector<32x1xf32>
    %51 = tpu.reciprocal %50 {approx = true} : vector<32x1xf32> -> vector<32x1xf32>
    %52 = vector.broadcast %51 : vector<32x1xf32> to vector<32x32xf32>
    %53 = arith.mulf %48, %52 : vector<32x32xf32>
    %cst_30 = arith.constant dense<0.000000e+00> : vector<32x16xf32>
    %54 = tpu.matmul %53, %38, %cst_30 {dimension_numbers = #tpu.dot_dimension_numbers<[1], [0], [0], [1], [0, 0, 1, 1], [], []>} : vector<32x32xf32>, vector<32x16xf32>, vector<32x16xf32> -> vector<32x16xf32>
    %c0_31 = arith.constant 0 : index
    %c0_32 = arith.constant 0 : index
    %c0_33 = arith.constant 0 : index
    %55 = vector.load %arg7[%c0_31, %c0_32, %c0_33] : memref<2x16x32xf32, #tpu.memory_space<vmem>>, vector<1x16x32xf32>
    %56 = vector.shape_cast %55 : vector<1x16x32xf32> to vector<16x32xf32>
    %cst_34 = arith.constant dense<0.000000e+00> : vector<32x32xf32>
    %57 = tpu.matmul %54, %56, %cst_34 {dimension_numbers = #tpu.dot_dimension_numbers<[1], [0], [0], [1], [0, 0, 1, 1], [], []>} : vector<32x16xf32>, vector<16x32xf32>, vector<32x32xf32> -> vector<32x32xf32>
    %58 = arith.addf %29, %57 : vector<32x32xf32>
    %c1 = arith.constant 1 : index
    %c0_35 = arith.constant 0 : index
    %c0_36 = arith.constant 0 : index
    %59 = vector.load %arg4[%c1, %c0_35, %c0_36] : memref<2x32x16xf32, #tpu.memory_space<vmem>>, vector<1x32x16xf32>
    %60 = vector.shape_cast %59 : vector<1x32x16xf32> to vector<32x16xf32>
    %cst_37 = arith.constant dense<0.000000e+00> : vector<32x16xf32>
    %61 = tpu.matmul %27, %60, %cst_37 {dimension_numbers = #tpu.dot_dimension_numbers<[1], [0], [0], [1], [0, 0, 1, 1], [], []>} : vector<32x32xf32>, vector<32x16xf32>, vector<32x16xf32> -> vector<32x16xf32>
    %c1_38 = arith.constant 1 : index
    %c0_39 = arith.constant 0 : index
    %c0_40 = arith.constant 0 : index
    %62 = vector.load %arg5[%c1_38, %c0_39, %c0_40] : memref<2x32x16xf32, #tpu.memory_space<vmem>>, vector<1x32x16xf32>
    %63 = vector.shape_cast %62 : vector<1x32x16xf32> to vector<32x16xf32>
    %cst_41 = arith.constant dense<0.000000e+00> : vector<32x16xf32>
    %64 = tpu.matmul %27, %63, %cst_41 {dimension_numbers = #tpu.dot_dimension_numbers<[1], [0], [0], [1], [0, 0, 1, 1], [], []>} : vector<32x32xf32>, vector<32x16xf32>, vector<32x16xf32> -> vector<32x16xf32>
    %c1_42 = arith.constant 1 : index
    %c0_43 = arith.constant 0 : index
    %c0_44 = arith.constant 0 : index
    %65 = vector.load %arg6[%c1_42, %c0_43, %c0_44] : memref<2x32x16xf32, #tpu.memory_space<vmem>>, vector<1x32x16xf32>
    %66 = vector.shape_cast %65 : vector<1x32x16xf32> to vector<32x16xf32>
    %cst_45 = arith.constant dense<0.000000e+00> : vector<32x16xf32>
    %67 = tpu.matmul %27, %66, %cst_45 {dimension_numbers = #tpu.dot_dimension_numbers<[1], [0], [0], [1], [0, 0, 1, 1], [], []>} : vector<32x32xf32>, vector<32x16xf32>, vector<32x16xf32> -> vector<32x16xf32>
    %68 = tpu.transpose %64, [1, 0] : vector<32x16xf32> -> vector<16x32xf32>
    %cst_46 = arith.constant dense<0.000000e+00> : vector<32x32xf32>
    %69 = tpu.matmul %61, %68, %cst_46 {dimension_numbers = #tpu.dot_dimension_numbers<[1], [0], [0], [1], [0, 0, 1, 1], [], []>} : vector<32x16xf32>, vector<16x32xf32>, vector<32x32xf32> -> vector<32x32xf32>
    %cst_47 = arith.constant 2.500000e-01 : f32
    %70 = vector.broadcast %cst_47 : f32 to vector<32x32xf32>
    %71 = arith.mulf %69, %70 : vector<32x32xf32>
    %72 = arith.addf %71, %5 : vector<32x32xf32>
    %cst_48 = arith.constant dense<0xFF800000> : vector<32xf32>
    %73 = vector.multi_reduction <maximumf>, %72, %cst_48 [1] : vector<32x32xf32> to vector<32xf32>
    %74 = vector.shape_cast %73 : vector<32xf32> to vector<32x1xf32>
    %75 = vector.broadcast %74 : vector<32x1xf32> to vector<32x32xf32>
    %76 = arith.subf %72, %75 : vector<32x32xf32>
    %77 = math.exp %76 : vector<32x32xf32>
    %cst_49 = arith.constant dense<0.000000e+00> : vector<32xf32>
    %78 = vector.multi_reduction <add>, %77, %cst_49 [1] : vector<32x32xf32> to vector<32xf32>
    %79 = vector.shape_cast %78 : vector<32xf32> to vector<32x1xf32>
    %80 = tpu.reciprocal %79 {approx = true} : vector<32x1xf32> -> vector<32x1xf32>
    %81 = vector.broadcast %80 : vector<32x1xf32> to vector<32x32xf32>
    %82 = arith.mulf %77, %81 : vector<32x32xf32>
    %cst_50 = arith.constant dense<0.000000e+00> : vector<32x16xf32>
    %83 = tpu.matmul %82, %67, %cst_50 {dimension_numbers = #tpu.dot_dimension_numbers<[1], [0], [0], [1], [0, 0, 1, 1], [], []>} : vector<32x32xf32>, vector<32x16xf32>, vector<32x16xf32> -> vector<32x16xf32>
    %c1_51 = arith.constant 1 : index
    %c0_52 = arith.constant 0 : index
    %c0_53 = arith.constant 0 : index
    %84 = vector.load %arg7[%c1_51, %c0_52, %c0_53] : memref<2x16x32xf32, #tpu.memory_space<vmem>>, vector<1x16x32xf32>
    %85 = vector.shape_cast %84 : vector<1x16x32xf32> to vector<16x32xf32>
    %cst_54 = arith.constant dense<0.000000e+00> : vector<32x32xf32>
    %86 = tpu.matmul %83, %85, %cst_54 {dimension_numbers = #tpu.dot_dimension_numbers<[1], [0], [0], [1], [0, 0, 1, 1], [], []>} : vector<32x16xf32>, vector<16x32xf32>, vector<32x32xf32> -> vector<32x32xf32>
    %87 = arith.addf %58, %86 : vector<32x32xf32>
    %c0_55 = arith.constant 0 : index
    %c0_56 = arith.constant 0 : index
    %88 = vector.load %arg9[%c0_55, %c0_56] : memref<1x32xf32, #tpu.memory_space<vmem>>, vector<1x32xf32>
    %c0_57 = arith.constant 0 : index
    %c0_58 = arith.constant 0 : index
    %89 = vector.load %arg10[%c0_57, %c0_58] : memref<1x32xf32, #tpu.memory_space<vmem>>, vector<1x32xf32>
    %c0_59 = arith.constant 0 : index
    %c0_60 = arith.constant 0 : index
    %90 = vector.load %arg15[%c0_59, %c0_60] : memref<1x32xf32, #tpu.memory_space<vmem>>, vector<1x32xf32>
    %c0_61 = arith.constant 0 : index
    %c0_62 = arith.constant 0 : index
    %91 = vector.load %arg21[%c0_61, %c0_62] : memref<32x32xf32, #tpu.memory_space<vmem>>, vector<32x32xf32>
    %cst_63 = arith.constant dense<0.000000e+00> : vector<32xf32>
    %92 = vector.multi_reduction <add>, %87, %cst_63 [1] : vector<32x32xf32> to vector<32xf32>
    %93 = vector.shape_cast %92 : vector<32xf32> to vector<32x1xf32>
    %cst_64 = arith.constant 3.200000e+01 : f32
    %94 = vector.broadcast %cst_64 : f32 to vector<32x1xf32>
    %95 = arith.divf %93, %94 : vector<32x1xf32>
    %96 = vector.broadcast %95 : vector<32x1xf32> to vector<32x32xf32>
    %97 = arith.subf %87, %96 : vector<32x32xf32>
    %98 = arith.mulf %97, %97 : vector<32x32xf32>
    %cst_65 = arith.constant dense<0.000000e+00> : vector<32xf32>
    %99 = vector.multi_reduction <add>, %98, %cst_65 [1] : vector<32x32xf32> to vector<32xf32>
    %100 = vector.shape_cast %99 : vector<32xf32> to vector<32x1xf32>
    %cst_66 = arith.constant 3.200000e+01 : f32
    %101 = vector.broadcast %cst_66 : f32 to vector<32x1xf32>
    %102 = arith.divf %100, %101 : vector<32x1xf32>
    %103 = vector.broadcast %95 : vector<32x1xf32> to vector<32x32xf32>
    %104 = arith.subf %87, %103 : vector<32x32xf32>
    %cst_67 = arith.constant 9.99999974E-6 : f32
    %105 = vector.broadcast %cst_67 : f32 to vector<32x1xf32>
    %106 = arith.addf %102, %105 : vector<32x1xf32>
    %107 = math.rsqrt %106 : vector<32x1xf32>
    %108 = vector.broadcast %107 : vector<32x1xf32> to vector<32x32xf32>
    %109 = arith.mulf %104, %108 : vector<32x32xf32>
    %110 = vector.broadcast %88 : vector<1x32xf32> to vector<32x32xf32>
    %111 = arith.mulf %109, %110 : vector<32x32xf32>
    %112 = vector.broadcast %89 : vector<1x32xf32> to vector<32x32xf32>
    %113 = arith.addf %111, %112 : vector<32x32xf32>
    %114 = vector.broadcast %90 : vector<1x32xf32> to vector<32x32xf32>
    %115 = arith.addf %87, %114 : vector<32x32xf32>
    %c0_68 = arith.constant 0 : index
    %c0_69 = arith.constant 0 : index
    %c0_70 = arith.constant 0 : index
    %116 = vector.load %arg11[%c0_68, %c0_69, %c0_70] : memref<2x32x16xf32, #tpu.memory_space<vmem>>, vector<1x32x16xf32>
    %117 = vector.shape_cast %116 : vector<1x32x16xf32> to vector<32x16xf32>
    %cst_71 = arith.constant dense<0.000000e+00> : vector<32x16xf32>
    %118 = tpu.matmul %113, %117, %cst_71 {dimension_numbers = #tpu.dot_dimension_numbers<[1], [0], [0], [1], [0, 0, 1, 1], [], []>} : vector<32x32xf32>, vector<32x16xf32>, vector<32x16xf32> -> vector<32x16xf32>
    %c0_72 = arith.constant 0 : index
    %c0_73 = arith.constant 0 : index
    %c0_74 = arith.constant 0 : index
    %119 = vector.load %arg12[%c0_72, %c0_73, %c0_74] : memref<2x32x16xf32, #tpu.memory_space<vmem>>, vector<1x32x16xf32>
    %120 = vector.shape_cast %119 : vector<1x32x16xf32> to vector<32x16xf32>
    %cst_75 = arith.constant dense<0.000000e+00> : vector<32x16xf32>
    %121 = tpu.matmul %113, %120, %cst_75 {dimension_numbers = #tpu.dot_dimension_numbers<[1], [0], [0], [1], [0, 0, 1, 1], [], []>} : vector<32x32xf32>, vector<32x16xf32>, vector<32x16xf32> -> vector<32x16xf32>
    %c0_76 = arith.constant 0 : index
    %c0_77 = arith.constant 0 : index
    %c0_78 = arith.constant 0 : index
    %122 = vector.load %arg13[%c0_76, %c0_77, %c0_78] : memref<2x32x16xf32, #tpu.memory_space<vmem>>, vector<1x32x16xf32>
    %123 = vector.shape_cast %122 : vector<1x32x16xf32> to vector<32x16xf32>
    %cst_79 = arith.constant dense<0.000000e+00> : vector<32x16xf32>
    %124 = tpu.matmul %113, %123, %cst_79 {dimension_numbers = #tpu.dot_dimension_numbers<[1], [0], [0], [1], [0, 0, 1, 1], [], []>} : vector<32x32xf32>, vector<32x16xf32>, vector<32x16xf32> -> vector<32x16xf32>
    %125 = tpu.transpose %121, [1, 0] : vector<32x16xf32> -> vector<16x32xf32>
    %cst_80 = arith.constant dense<0.000000e+00> : vector<32x32xf32>
    %126 = tpu.matmul %118, %125, %cst_80 {dimension_numbers = #tpu.dot_dimension_numbers<[1], [0], [0], [1], [0, 0, 1, 1], [], []>} : vector<32x16xf32>, vector<16x32xf32>, vector<32x32xf32> -> vector<32x32xf32>
    %cst_81 = arith.constant 2.500000e-01 : f32
    %127 = vector.broadcast %cst_81 : f32 to vector<32x32xf32>
    %128 = arith.mulf %126, %127 : vector<32x32xf32>
    %129 = arith.addf %128, %91 : vector<32x32xf32>
    %cst_82 = arith.constant dense<0xFF800000> : vector<32xf32>
    %130 = vector.multi_reduction <maximumf>, %129, %cst_82 [1] : vector<32x32xf32> to vector<32xf32>
    %131 = vector.shape_cast %130 : vector<32xf32> to vector<32x1xf32>
    %132 = vector.broadcast %131 : vector<32x1xf32> to vector<32x32xf32>
    %133 = arith.subf %129, %132 : vector<32x32xf32>
    %134 = math.exp %133 : vector<32x32xf32>
    %cst_83 = arith.constant dense<0.000000e+00> : vector<32xf32>
    %135 = vector.multi_reduction <add>, %134, %cst_83 [1] : vector<32x32xf32> to vector<32xf32>
    %136 = vector.shape_cast %135 : vector<32xf32> to vector<32x1xf32>
    %137 = tpu.reciprocal %136 {approx = true} : vector<32x1xf32> -> vector<32x1xf32>
    %138 = vector.broadcast %137 : vector<32x1xf32> to vector<32x32xf32>
    %139 = arith.mulf %134, %138 : vector<32x32xf32>
    %cst_84 = arith.constant dense<0.000000e+00> : vector<32x16xf32>
    %140 = tpu.matmul %139, %124, %cst_84 {dimension_numbers = #tpu.dot_dimension_numbers<[1], [0], [0], [1], [0, 0, 1, 1], [], []>} : vector<32x32xf32>, vector<32x16xf32>, vector<32x16xf32> -> vector<32x16xf32>
    %c0_85 = arith.constant 0 : index
    %c0_86 = arith.constant 0 : index
    %c0_87 = arith.constant 0 : index
    %141 = vector.load %arg14[%c0_85, %c0_86, %c0_87] : memref<2x16x32xf32, #tpu.memory_space<vmem>>, vector<1x16x32xf32>
    %142 = vector.shape_cast %141 : vector<1x16x32xf32> to vector<16x32xf32>
    %cst_88 = arith.constant dense<0.000000e+00> : vector<32x32xf32>
    %143 = tpu.matmul %140, %142, %cst_88 {dimension_numbers = #tpu.dot_dimension_numbers<[1], [0], [0], [1], [0, 0, 1, 1], [], []>} : vector<32x16xf32>, vector<16x32xf32>, vector<32x32xf32> -> vector<32x32xf32>
    %144 = arith.addf %115, %143 : vector<32x32xf32>
    %c1_89 = arith.constant 1 : index
    %c0_90 = arith.constant 0 : index
    %c0_91 = arith.constant 0 : index
    %145 = vector.load %arg11[%c1_89, %c0_90, %c0_91] : memref<2x32x16xf32, #tpu.memory_space<vmem>>, vector<1x32x16xf32>
    %146 = vector.shape_cast %145 : vector<1x32x16xf32> to vector<32x16xf32>
    %cst_92 = arith.constant dense<0.000000e+00> : vector<32x16xf32>
    %147 = tpu.matmul %113, %146, %cst_92 {dimension_numbers = #tpu.dot_dimension_numbers<[1], [0], [0], [1], [0, 0, 1, 1], [], []>} : vector<32x32xf32>, vector<32x16xf32>, vector<32x16xf32> -> vector<32x16xf32>
    %c1_93 = arith.constant 1 : index
    %c0_94 = arith.constant 0 : index
    %c0_95 = arith.constant 0 : index
    %148 = vector.load %arg12[%c1_93, %c0_94, %c0_95] : memref<2x32x16xf32, #tpu.memory_space<vmem>>, vector<1x32x16xf32>
    %149 = vector.shape_cast %148 : vector<1x32x16xf32> to vector<32x16xf32>
    %cst_96 = arith.constant dense<0.000000e+00> : vector<32x16xf32>
    %150 = tpu.matmul %113, %149, %cst_96 {dimension_numbers = #tpu.dot_dimension_numbers<[1], [0], [0], [1], [0, 0, 1, 1], [], []>} : vector<32x32xf32>, vector<32x16xf32>, vector<32x16xf32> -> vector<32x16xf32>
    %c1_97 = arith.constant 1 : index
    %c0_98 = arith.constant 0 : index
    %c0_99 = arith.constant 0 : index
    %151 = vector.load %arg13[%c1_97, %c0_98, %c0_99] : memref<2x32x16xf32, #tpu.memory_space<vmem>>, vector<1x32x16xf32>
    %152 = vector.shape_cast %151 : vector<1x32x16xf32> to vector<32x16xf32>
    %cst_100 = arith.constant dense<0.000000e+00> : vector<32x16xf32>
    %153 = tpu.matmul %113, %152, %cst_100 {dimension_numbers = #tpu.dot_dimension_numbers<[1], [0], [0], [1], [0, 0, 1, 1], [], []>} : vector<32x32xf32>, vector<32x16xf32>, vector<32x16xf32> -> vector<32x16xf32>
    %154 = tpu.transpose %150, [1, 0] : vector<32x16xf32> -> vector<16x32xf32>
    %cst_101 = arith.constant dense<0.000000e+00> : vector<32x32xf32>
    %155 = tpu.matmul %147, %154, %cst_101 {dimension_numbers = #tpu.dot_dimension_numbers<[1], [0], [0], [1], [0, 0, 1, 1], [], []>} : vector<32x16xf32>, vector<16x32xf32>, vector<32x32xf32> -> vector<32x32xf32>
    %cst_102 = arith.constant 2.500000e-01 : f32
    %156 = vector.broadcast %cst_102 : f32 to vector<32x32xf32>
    %157 = arith.mulf %155, %156 : vector<32x32xf32>
    %158 = arith.addf %157, %91 : vector<32x32xf32>
    %cst_103 = arith.constant dense<0xFF800000> : vector<32xf32>
    %159 = vector.multi_reduction <maximumf>, %158, %cst_103 [1] : vector<32x32xf32> to vector<32xf32>
    %160 = vector.shape_cast %159 : vector<32xf32> to vector<32x1xf32>
    %161 = vector.broadcast %160 : vector<32x1xf32> to vector<32x32xf32>
    %162 = arith.subf %158, %161 : vector<32x32xf32>
    %163 = math.exp %162 : vector<32x32xf32>
    %cst_104 = arith.constant dense<0.000000e+00> : vector<32xf32>
    %164 = vector.multi_reduction <add>, %163, %cst_104 [1] : vector<32x32xf32> to vector<32xf32>
    %165 = vector.shape_cast %164 : vector<32xf32> to vector<32x1xf32>
    %166 = tpu.reciprocal %165 {approx = true} : vector<32x1xf32> -> vector<32x1xf32>
    %167 = vector.broadcast %166 : vector<32x1xf32> to vector<32x32xf32>
    %168 = arith.mulf %163, %167 : vector<32x32xf32>
    %cst_105 = arith.constant dense<0.000000e+00> : vector<32x16xf32>
    %169 = tpu.matmul %168, %153, %cst_105 {dimension_numbers = #tpu.dot_dimension_numbers<[1], [0], [0], [1], [0, 0, 1, 1], [], []>} : vector<32x32xf32>, vector<32x16xf32>, vector<32x16xf32> -> vector<32x16xf32>
    %c1_106 = arith.constant 1 : index
    %c0_107 = arith.constant 0 : index
    %c0_108 = arith.constant 0 : index
    %170 = vector.load %arg14[%c1_106, %c0_107, %c0_108] : memref<2x16x32xf32, #tpu.memory_space<vmem>>, vector<1x16x32xf32>
    %171 = vector.shape_cast %170 : vector<1x16x32xf32> to vector<16x32xf32>
    %cst_109 = arith.constant dense<0.000000e+00> : vector<32x32xf32>
    %172 = tpu.matmul %169, %171, %cst_109 {dimension_numbers = #tpu.dot_dimension_numbers<[1], [0], [0], [1], [0, 0, 1, 1], [], []>} : vector<32x16xf32>, vector<16x32xf32>, vector<32x32xf32> -> vector<32x32xf32>
    %173 = arith.addf %144, %172 : vector<32x32xf32>
    %c0_110 = arith.constant 0 : index
    %c0_111 = arith.constant 0 : index
    %174 = vector.load %arg16[%c0_110, %c0_111] : memref<32x64xf32, #tpu.memory_space<vmem>>, vector<32x64xf32>
    %cst_112 = arith.constant dense<0.000000e+00> : vector<32x64xf32>
    %175 = tpu.matmul %173, %174, %cst_112 {dimension_numbers = #tpu.dot_dimension_numbers<[1], [0], [0], [1], [0, 0, 1, 1], [], []>} : vector<32x32xf32>, vector<32x64xf32>, vector<32x64xf32> -> vector<32x64xf32>
    %c0_113 = arith.constant 0 : index
    %c0_114 = arith.constant 0 : index
    %176 = vector.load %arg17[%c0_113, %c0_114] : memref<1x64xf32, #tpu.memory_space<vmem>>, vector<1x64xf32>
    %177 = vector.broadcast %176 : vector<1x64xf32> to vector<32x64xf32>
    %178 = arith.addf %175, %177 : vector<32x64xf32>
    %cst_115 = arith.constant 5.000000e-01 : f32
    %179 = vector.broadcast %cst_115 : f32 to vector<32x64xf32>
    %180 = arith.mulf %179, %178 : vector<32x64xf32>
    %cst_116 = arith.constant 0.707106769 : f32
    %181 = vector.broadcast %cst_116 : f32 to vector<32x64xf32>
    %182 = arith.mulf %178, %181 : vector<32x64xf32>
    %183 = math.erf %182 : vector<32x64xf32>
    %cst_117 = arith.constant 1.000000e+00 : f32
    %184 = vector.broadcast %cst_117 : f32 to vector<32x64xf32>
    %185 = arith.addf %184, %183 : vector<32x64xf32>
    %186 = arith.mulf %180, %185 : vector<32x64xf32>
    %c0_118 = arith.constant 0 : index
    %c0_119 = arith.constant 0 : index
    %187 = vector.load %arg18[%c0_118, %c0_119] : memref<64x32xf32, #tpu.memory_space<vmem>>, vector<64x32xf32>
    %cst_120 = arith.constant dense<0.000000e+00> : vector<32x32xf32>
    %188 = tpu.matmul %186, %187, %cst_120 {dimension_numbers = #tpu.dot_dimension_numbers<[1], [0], [0], [1], [0, 0, 1, 1], [], []>} : vector<32x64xf32>, vector<64x32xf32>, vector<32x32xf32> -> vector<32x32xf32>
    %c0_121 = arith.constant 0 : index
    %c0_122 = arith.constant 0 : index
    %189 = vector.load %arg19[%c0_121, %c0_122] : memref<1x32xf32, #tpu.memory_space<vmem>>, vector<1x32xf32>
    %190 = vector.broadcast %189 : vector<1x32xf32> to vector<32x32xf32>
    %191 = arith.addf %188, %190 : vector<32x32xf32>
    %192 = arith.addf %191, %173 : vector<32x32xf32>
    %c0_123 = arith.constant 0 : index
    %c0_124 = arith.constant 0 : index
    %c0_125 = arith.constant 0 : index
    %193 = vector.load %arg22[%c0_123, %c0_124, %c0_125] : memref<1x32x32xf32, #tpu.memory_space<vmem>>, vector<1x32x32xf32>
    %194 = vector.shape_cast %193 : vector<1x32x32xf32> to vector<32x32xf32>
    %195 = vector.shape_cast %192 : vector<32x32xf32> to vector<1x32x32xf32>
    tpu.vector_store %arg22[%c0_123, %c0_124, %c0_125], %195 {strides = array<i32>} : memref<1x32x32xf32, #tpu.memory_space<vmem>>, vector<1x32x32xf32>,
    return
  }
  func.func @transform_0(%arg0: i32) -> (i32, i32, i32) {
    %c0_i32 = arith.constant 0 : i32
    %c0_i32_0 = arith.constant 0 : i32
    %c0_i32_1 = arith.constant 0 : i32
    return %arg0, %c0_i32, %c0_i32_0 : i32, i32, i32
  }
  func.func @transform_1(%arg0: i32) -> (i32, i32) {
    %c0_i32 = arith.constant 0 : i32
    %c0_i32_0 = arith.constant 0 : i32
    %c0_i32_1 = arith.constant 0 : i32
    return %c0_i32, %c0_i32_0 : i32, i32
  }
  func.func @transform_2(%arg0: i32) -> (i32, i32) {
    %c0_i32 = arith.constant 0 : i32
    %c0_i32_0 = arith.constant 0 : i32
    %c0_i32_1 = arith.constant 0 : i32
    return %c0_i32, %c0_i32_0 : i32, i32
  }
  func.func @transform_3(%arg0: i32) -> (i32, i32, i32) {
    %c0_i32 = arith.constant 0 : i32
    %c0_i32_0 = arith.constant 0 : i32
    %c0_i32_1 = arith.constant 0 : i32
    %c0_i32_2 = arith.constant 0 : i32
    return %c0_i32, %c0_i32_0, %c0_i32_1 : i32, i32, i32
  }
  func.func @transform_4(%arg0: i32) -> (i32, i32, i32) {
    %c0_i32 = arith.constant 0 : i32
    %c0_i32_0 = arith.constant 0 : i32
    %c0_i32_1 = arith.constant 0 : i32
    %c0_i32_2 = arith.constant 0 : i32
    return %c0_i32, %c0_i32_0, %c0_i32_1 : i32, i32, i32
  }
  func.func @transform_5(%arg0: i32) -> (i32, i32, i32) {
    %c0_i32 = arith.constant 0 : i32
    %c0_i32_0 = arith.constant 0 : i32
    %c0_i32_1 = arith.constant 0 : i32
    %c0_i32_2 = arith.constant 0 : i32
    return %c0_i32, %c0_i32_0, %c0_i32_1 : i32, i32, i32
  }
  func.func @transform_6(%arg0: i32) -> (i32, i32, i32) {
    %c0_i32 = arith.constant 0 : i32
    %c0_i32_0 = arith.constant 0 : i32
    %c0_i32_1 = arith.constant 0 : i32
    %c0_i32_2 = arith.constant 0 : i32
    return %c0_i32, %c0_i32_0, %c0_i32_1 : i32, i32, i32
  }
  func.func @transform_7(%arg0: i32) -> (i32, i32) {
    %c0_i32 = arith.constant 0 : i32
    %c0_i32_0 = arith.constant 0 : i32
    %c0_i32_1 = arith.constant 0 : i32
    return %c0_i32, %c0_i32_0 : i32, i32
  }
  func.func @transform_8(%arg0: i32) -> (i32, i32) {
    %c0_i32 = arith.constant 0 : i32
    %c0_i32_0 = arith.constant 0 : i32
    %c0_i32_1 = arith.constant 0 : i32
    return %c0_i32, %c0_i32_0 : i32, i32
  }
  func.func @transform_9(%arg0: i32) -> (i32, i32) {
    %c0_i32 = arith.constant 0 : i32
    %c0_i32_0 = arith.constant 0 : i32
    %c0_i32_1 = arith.constant 0 : i32
    return %c0_i32, %c0_i32_0 : i32, i32
  }
  func.func @transform_10(%arg0: i32) -> (i32, i32, i32) {
    %c0_i32 = arith.constant 0 : i32
    %c0_i32_0 = arith.constant 0 : i32
    %c0_i32_1 = arith.constant 0 : i32
    %c0_i32_2 = arith.constant 0 : i32
    return %c0_i32, %c0_i32_0, %c0_i32_1 : i32, i32, i32
  }
  func.func @transform_11(%arg0: i32) -> (i32, i32, i32) {
    %c0_i32 = arith.constant 0 : i32
    %c0_i32_0 = arith.constant 0 : i32
    %c0_i32_1 = arith.constant 0 : i32
    %c0_i32_2 = arith.constant 0 : i32
    return %c0_i32, %c0_i32_0, %c0_i32_1 : i32, i32, i32
  }
  func.func @transform_12(%arg0: i32) -> (i32, i32, i32) {
    %c0_i32 = arith.constant 0 : i32
    %c0_i32_0 = arith.constant 0 : i32
    %c0_i32_1 = arith.constant 0 : i32
    %c0_i32_2 = arith.constant 0 : i32
    return %c0_i32, %c0_i32_0, %c0_i32_1 : i32, i32, i32
  }
  func.func @transform_13(%arg0: i32) -> (i32, i32, i32) {
    %c0_i32 = arith.constant 0 : i32
    %c0_i32_0 = arith.constant 0 : i32
    %c0_i32_1 = arith.constant 0 : i32
    %c0_i32_2 = arith.constant 0 : i32
    return %c0_i32, %c0_i32_0, %c0_i32_1 : i32, i32, i32
  }
  func.func @transform_14(%arg0: i32) -> (i32, i32) {
    %c0_i32 = arith.constant 0 : i32
    %c0_i32_0 = arith.constant 0 : i32
    %c0_i32_1 = arith.constant 0 : i32
    return %c0_i32, %c0_i32_0 : i32, i32
  }
  func.func @transform_15(%arg0: i32) -> (i32, i32) {
    %c0_i32 = arith.constant 0 : i32
    %c0_i32_0 = arith.constant 0 : i32
    %c0_i32_1 = arith.constant 0 : i32
    return %c0_i32, %c0_i32_0 : i32, i32
  }
  func.func @transform_16(%arg0: i32) -> (i32, i32) {
    %c0_i32 = arith.constant 0 : i32
    %c0_i32_0 = arith.constant 0 : i32
    %c0_i32_1 = arith.constant 0 : i32
    return %c0_i32, %c0_i32_0 : i32, i32
  }
  func.func @transform_17(%arg0: i32) -> (i32, i32) {
    %c0_i32 = arith.constant 0 : i32
    %c0_i32_0 = arith.constant 0 : i32
    %c0_i32_1 = arith.constant 0 : i32
    return %c0_i32, %c0_i32_0 : i32, i32
  }
  func.func @transform_18(%arg0: i32) -> (i32, i32) {
    %c0_i32 = arith.constant 0 : i32
    %c0_i32_0 = arith.constant 0 : i32
    %c0_i32_1 = arith.constant 0 : i32
    return %c0_i32, %c0_i32_0 : i32, i32
  }
  func.func @transform_19(%arg0: i32) -> (i32, i32) {
    %c0_i32 = arith.constant 0 : i32
    %c0_i32_0 = arith.constant 0 : i32
    %c0_i32_1 = arith.constant 0 : i32
    return %c0_i32, %c0_i32_0 : i32, i32
  }
  func.func @transform_20(%arg0: i32) -> (i32, i32) {
    %c0_i32 = arith.constant 0 : i32
    %c0_i32_0 = arith.constant 0 : i32
    %c0_i32_1 = arith.constant 0 : i32
    return %c0_i32, %c0_i32_0 : i32, i32
  }
  func.func @transform_21(%arg0: i32) -> (i32, i32, i32) {
    %c0_i32 = arith.constant 0 : i32
    %c0_i32_0 = arith.constant 0 : i32
    %c0_i32_1 = arith.constant 0 : i32
    return %arg0, %c0_i32, %c0_i32_0 : i32, i32, i32
  }
}

</mosaic_0001>

<llo_original>
// kernel: cross_intra_encoder_block.1
$region0: #{cross_intra_encoder_block.1}
  #allocation0 [shape = 'u32[]', space=smem, size = 0x4, offset = 0x4, fixed_abs, tag = 'smem constant byte address 0x4 - core index']
  #allocation1 [shape = 'u32[72,128]{1,0:T(1,128)}', space=vmem, size = 0x9000, scoped, tag = 'internal scratch']
  %s0 = inlined_call_operand.vmem [shape: f32[2,32,32], index: 0, kind: input, shape index: {}]
  %s1 = inlined_call_operand.vmem [shape: f32[1,32], index: 1, kind: input, shape index: {}]
  %s2 = inlined_call_operand.vmem [shape: f32[1,32], index: 2, kind: input, shape index: {}]
  %s3 = inlined_call_operand.vmem [shape: f32[2,32,16], index: 3, kind: input, shape index: {}]
  %s4 = inlined_call_operand.vmem [shape: f32[2,32,16], index: 4, kind: input, shape index: {}]
  %s5 = inlined_call_operand.vmem [shape: f32[2,32,16], index: 5, kind: input, shape index: {}]
  %s6 = inlined_call_operand.vmem [shape: f32[2,16,32], index: 6, kind: input, shape index: {}]
  %s7 = inlined_call_operand.vmem [shape: f32[1,32], index: 7, kind: input, shape index: {}]
  %s8 = inlined_call_operand.vmem [shape: f32[1,32], index: 8, kind: input, shape index: {}]
  %s9 = inlined_call_operand.vmem [shape: f32[1,32], index: 9, kind: input, shape index: {}]
  %s10 = inlined_call_operand.vmem [shape: f32[2,32,16], index: 10, kind: input, shape index: {}]
  %s11 = inlined_call_operand.vmem [shape: f32[2,32,16], index: 11, kind: input, shape index: {}]
  %s12 = inlined_call_operand.vmem [shape: f32[2,32,16], index: 12, kind: input, shape index: {}]
  %s13 = inlined_call_operand.vmem [shape: f32[2,16,32], index: 13, kind: input, shape index: {}]
  %s14 = inlined_call_operand.vmem [shape: f32[1,32], index: 14, kind: input, shape index: {}]
  %s15 = inlined_call_operand.vmem [shape: f32[32,64], index: 15, kind: input, shape index: {}]
  %s16 = inlined_call_operand.vmem [shape: f32[1,64], index: 16, kind: input, shape index: {}]
  %s17 = inlined_call_operand.vmem [shape: f32[64,32], index: 17, kind: input, shape index: {}]
  %s18 = inlined_call_operand.vmem [shape: f32[1,32], index: 18, kind: input, shape index: {}]
  %s19 = inlined_call_operand.vmem [shape: f32[32,32], index: 19, kind: input, shape index: {}]
  %s20 = inlined_call_operand.vmem [shape: f32[32,32], index: 20, kind: input, shape index: {}]
  %s21 = inlined_call_operand.hbm [shape: f32[2,32,32], index: 21, kind: output, shape index: {}]
  %s22 = sld [smem:[#allocation0]]
  $region117: #{cross_intra_encoder_block.1} parent=0
    _
  %s24 = ssub.s32 1, %s22
  %s25 = scalar_select 0, %s24, %s22
  $region1: #{cross_intra_encoder_block.1} parent=0
    #allocation2 [shape = 'u8[32768]{0}', space=vmem, size = 0x8000, scoped, tag = 'output window, operand 0']
    #allocation3 [shape = 's32[2]{0}', space=sflag, size = 0x8, scoped, tag = 'scoped memory for cross_intra_encoder_block.1']
    %26 = vsyncpa [#allocation3], 0
    %s27 = scalar_lea.sflag [#allocation3], 1
    %28 = vsyncpa %s27, 0
    loop: start=0, step=1, limit=4
    $region2: #{cross_intra_encoder_block.1} parent=1 // loop_pre_header
      _
    $region3: #{cross_intra_encoder_block.1} parent=1 // loop_header
      %s30 = sphi 0, %s34
      %p31 = scmp.ge.s32.totalorder %s30, 4
      %s40 = sphi 0, %s42
      %s43 = sphi 0, %s40
      %s44 = sphi 0, %s43
      %s60 = sphi 0, %s44
      %s64 = sphi 0, %s64
      %s66 = sphi 0, %s64
      %s67 = sphi 0, %s66
      %s81 = sphi 0, %s67
      %s85 = sphi 0, %s85
      %s87 = sphi 0, %s85
      %s88 = sphi 0, %s87
      %s102 = sphi 0, %s88
      %s106 = sphi 0, %s106
      %s108 = sphi 0, %s106
      %s109 = sphi 0, %s108
      %s123 = sphi 0, %s109
      %s127 = sphi 0, %s127
      %s129 = sphi 0, %s127
      %s130 = sphi 0, %s129
      %s144 = sphi 0, %s130
      %s148 = sphi 0, %s148
      %s150 = sphi 0, %s148
      %s151 = sphi 0, %s150
      %s165 = sphi 0, %s151
      %s169 = sphi 0, %s169
      %s171 = sphi 0, %s169
      %s172 = sphi 0, %s171
      %s186 = sphi 0, %s172
      %s190 = sphi 0, %s190
      %s192 = sphi 0, %s190
      %s193 = sphi 0, %s192
      %s207 = sphi 0, %s193
      %s211 = sphi 0, %s211
      %s213 = sphi 0, %s211
      %s214 = sphi 0, %s213
      %s228 = sphi 0, %s214
      %s232 = sphi 0, %s232
      %s234 = sphi 0, %s232
      %s235 = sphi 0, %s234
      %s249 = sphi 0, %s235
      %s253 = sphi 0, %s253
      %s255 = sphi 0, %s253
      %s256 = sphi 0, %s255
      %s270 = sphi 0, %s256
      %s274 = sphi 0, %s274
      %s276 = sphi 0, %s274
      %s277 = sphi 0, %s276
      %s291 = sphi 0, %s277
      %s295 = sphi 0, %s295
      %s297 = sphi 0, %s295
      %s298 = sphi 0, %s297
      %s312 = sphi 0, %s298
      %s316 = sphi 0, %s316
      %s318 = sphi 0, %s316
      %s319 = sphi 0, %s318
      %s333 = sphi 0, %s319
      %s337 = sphi 0, %s337
      %s339 = sphi 0, %s337
      %s340 = sphi 0, %s339
      %s354 = sphi 0, %s340
      %s358 = sphi 0, %s358
      %s360 = sphi 0, %s358
      %s361 = sphi 0, %s360
      %s375 = sphi 0, %s361
      %s379 = sphi 0, %s379
      %s381 = sphi 0, %s379
      %s382 = sphi 0, %s381
      %s396 = sphi 0, %s382
      %s400 = sphi 0, %s400
      %s402 = sphi 0, %s400
      %s403 = sphi 0, %s402
      %s417 = sphi 0, %s403
      %s421 = sphi 0, %s421
      %s423 = sphi 0, %s421
      %s424 = sphi 0, %s423
      %s438 = sphi 0, %s424
      %s442 = sphi 0, %s442
      %s444 = sphi 0, %s442
      %s445 = sphi 0, %s444
      %s459 = sphi 0, %s445
      %s463 = sphi 0, %s463
      %s465 = sphi 0, %s463
      %s466 = sphi 0, %s465
      %s480 = sphi 0, %s466
      %s486 = sphi 0, %s488
      %s489 = sphi 0, %s486
      %s490 = sphi 0, %s489
      %s506 = sphi 0, %s490
    $region4: #{cross_intra_encoder_block.1} parent=1 // loop_header_branch
      %33 = sbr.rel (%p31) target = $region8
    $region5: #{cross_intra_encoder_block.1} parent=1 // loop_body
      %s35 = ssub.s32 %s30, 1
      %s36 = ssub.s32 %s30, 2
      %s37 = sadd.s32 %s30, 1
      %s38 = ssub.s32 %s30, %s37
      %p39 = scmp.eq.s32.totalorder %s38, 0
      %s41 = sadd.s32 %s40, 1
      %s42 = scalar_select %p39, %s40, %s41
      %p45 = pneg %p39
      %p46 = scmp.eq.s32.totalorder %s30, 1
      %p47 = por %p45, %p46
      %p48 = scmp.ne.s32.totalorder %s40, %s43
      %p49 = scmp.eq.s32.totalorder %s30, 0
      %p50 = por %p48, %p49
      %p51 = scmp.ne.s32.totalorder %s40, %s43
      %p52 = scmp.eq.s32.totalorder %s35, 1
      %p53 = por %p51, %p52
      %p54 = scmp.ne.s32.totalorder %s43, %s44
      %p55 = scmp.eq.s32.totalorder %s35, 0
      %p56 = por %p54, %p55
      %p57 = scmp.ne.s32.totalorder %s43, %s44
      %p58 = scmp.eq.s32.totalorder %s36, 1
      %p59 = por %p57, %p58
      %p61 = scmp.ne.s32.totalorder %s44, %s60
      %p62 = scmp.eq.s32.totalorder %s36, 0
      %p63 = por %p61, %p62
      %s65 = sadd.s32 %s64, 1
      %p68 = scmp.eq.s32.totalorder %s30, 1
      %p69 = scmp.ne.s32.totalorder %s64, %s66
      %p70 = scmp.eq.s32.totalorder %s30, 0
      %p71 = por %p69, %p70
      %p72 = scmp.ne.s32.totalorder %s64, %s66
      %p73 = scmp.eq.s32.totalorder %s35, 1
      %p74 = por %p72, %p73
      %p75 = scmp.ne.s32.totalorder %s66, %s67
      %p76 = scmp.eq.s32.totalorder %s35, 0
      %p77 = por %p75, %p76
      %p78 = scmp.ne.s32.totalorder %s66, %s67
      %p79 = scmp.eq.s32.totalorder %s36, 1
      %p80 = por %p78, %p79
      %p82 = scmp.ne.s32.totalorder %s67, %s81
      %p83 = scmp.eq.s32.totalorder %s36, 0
      %p84 = por %p82, %p83
      %s86 = sadd.s32 %s85, 1
      %p89 = scmp.eq.s32.totalorder %s30, 1
      %p90 = scmp.ne.s32.totalorder %s85, %s87
      %p91 = scmp.eq.s32.totalorder %s30, 0
      %p92 = por %p90, %p91
      %p93 = scmp.ne.s32.totalorder %s85, %s87
      %p94 = scmp.eq.s32.totalorder %s35, 1
      %p95 = por %p93, %p94
      %p96 = scmp.ne.s32.totalorder %s87, %s88
      %p97 = scmp.eq.s32.totalorder %s35, 0
      %p98 = por %p96, %p97
      %p99 = scmp.ne.s32.totalorder %s87, %s88
      %p100 = scmp.eq.s32.totalorder %s36, 1
      %p101 = por %p99, %p100
      %p103 = scmp.ne.s32.totalorder %s88, %s102
      %p104 = scmp.eq.s32.totalorder %s36, 0
      %p105 = por %p103, %p104
      %s107 = sadd.s32 %s106, 1
      %p110 = scmp.eq.s32.totalorder %s30, 1
      %p111 = scmp.ne.s32.totalorder %s106, %s108
      %p112 = scmp.eq.s32.totalorder %s30, 0
      %p113 = por %p111, %p112
      %p114 = scmp.ne.s32.totalorder %s106, %s108
      %p115 = scmp.eq.s32.totalorder %s35, 1
      %p116 = por %p114, %p115
      %p117 = scmp.ne.s32.totalorder %s108, %s109
      %p118 = scmp.eq.s32.totalorder %s35, 0
      %p119 = por %p117, %p118
      %p120 = scmp.ne.s32.totalorder %s108, %s109
      %p121 = scmp.eq.s32.totalorder %s36, 1
      %p122 = por %p120, %p121
      %p124 = scmp.ne.s32.totalorder %s109, %s123
      %p125 = scmp.eq.s32.totalorder %s36, 0
      %p126 = por %p124, %p125
      %s128 = sadd.s32 %s127, 1
      %p131 = scmp.eq.s32.totalorder %s30, 1
      %p132 = scmp.ne.s32.totalorder %s127, %s129
      %p133 = scmp.eq.s32.totalorder %s30, 0
      %p134 = por %p132, %p133
      %p135 = scmp.ne.s32.totalorder %s127, %s129
      %p136 = scmp.eq.s32.totalorder %s35, 1
      %p137 = por %p135, %p136
      %p138 = scmp.ne.s32.totalorder %s129, %s130
      %p139 = scmp.eq.s32.totalorder %s35, 0
      %p140 = por %p138, %p139
      %p141 = scmp.ne.s32.totalorder %s129, %s130
      %p142 = scmp.eq.s32.totalorder %s36, 1
      %p143 = por %p141, %p142
      %p145 = scmp.ne.s32.totalorder %s130, %s144
      %p146 = scmp.eq.s32.totalorder %s36, 0
      %p147 = por %p145, %p146
      %s149 = sadd.s32 %s148, 1
      %p152 = scmp.eq.s32.totalorder %s30, 1
      %p153 = scmp.ne.s32.totalorder %s148, %s150
      %p154 = scmp.eq.s32.totalorder %s30, 0
      %p155 = por %p153, %p154
      %p156 = scmp.ne.s32.totalorder %s148, %s150
      %p157 = scmp.eq.s32.totalorder %s35, 1
      %p158 = por %p156, %p157
      %p159 = scmp.ne.s32.totalorder %s150, %s151
      %p160 = scmp.eq.s32.totalorder %s35, 0
      %p161 = por %p159, %p160
      %p162 = scmp.ne.s32.totalorder %s150, %s151
      %p163 = scmp.eq.s32.totalorder %s36, 1
      %p164 = por %p162, %p163
      %p166 = scmp.ne.s32.totalorder %s151, %s165
      %p167 = scmp.eq.s32.totalorder %s36, 0
      %p168 = por %p166, %p167
      %s170 = sadd.s32 %s169, 1
      %p173 = scmp.eq.s32.totalorder %s30, 1
      %p174 = scmp.ne.s32.totalorder %s169, %s171
      %p175 = scmp.eq.s32.totalorder %s30, 0
      %p176 = por %p174, %p175
      %p177 = scmp.ne.s32.totalorder %s169, %s171
      %p178 = scmp.eq.s32.totalorder %s35, 1
      %p179 = por %p177, %p178
      %p180 = scmp.ne.s32.totalorder %s171, %s172
      %p181 = scmp.eq.s32.totalorder %s35, 0
      %p182 = por %p180, %p181
      %p183 = scmp.ne.s32.totalorder %s171, %s172
      %p184 = scmp.eq.s32.totalorder %s36, 1
      %p185 = por %p183, %p184
      %p187 = scmp.ne.s32.totalorder %s172, %s186
      %p188 = scmp.eq.s32.totalorder %s36, 0
      %p189 = por %p187, %p188
      %s191 = sadd.s32 %s190, 1
      %p194 = scmp.eq.s32.totalorder %s30, 1
      %p195 = scmp.ne.s32.totalorder %s190, %s192
      %p196 = scmp.eq.s32.totalorder %s30, 0
      %p197 = por %p195, %p196
      %p198 = scmp.ne.s32.totalorder %s190, %s192
      %p199 = scmp.eq.s32.totalorder %s35, 1
      %p200 = por %p198, %p199
      %p201 = scmp.ne.s32.totalorder %s192, %s193
      %p202 = scmp.eq.s32.totalorder %s35, 0
      %p203 = por %p201, %p202
      %p204 = scmp.ne.s32.totalorder %s192, %s193
      %p205 = scmp.eq.s32.totalorder %s36, 1
      %p206 = por %p204, %p205
      %p208 = scmp.ne.s32.totalorder %s193, %s207
      %p209 = scmp.eq.s32.totalorder %s36, 0
      %p210 = por %p208, %p209
      %s212 = sadd.s32 %s211, 1
      %p215 = scmp.eq.s32.totalorder %s30, 1
      %p216 = scmp.ne.s32.totalorder %s211, %s213
      %p217 = scmp.eq.s32.totalorder %s30, 0
      %p218 = por %p216, %p217
      %p219 = scmp.ne.s32.totalorder %s211, %s213
      %p220 = scmp.eq.s32.totalorder %s35, 1
      %p221 = por %p219, %p220
      %p222 = scmp.ne.s32.totalorder %s213, %s214
      %p223 = scmp.eq.s32.totalorder %s35, 0
      %p224 = por %p222, %p223
      %p225 = scmp.ne.s32.totalorder %s213, %s214
      %p226 = scmp.eq.s32.totalorder %s36, 1
      %p227 = por %p225, %p226
      %p229 = scmp.ne.s32.totalorder %s214, %s228
      %p230 = scmp.eq.s32.totalorder %s36, 0
      %p231 = por %p229, %p230
      %s233 = sadd.s32 %s232, 1
      %p236 = scmp.eq.s32.totalorder %s30, 1
      %p237 = scmp.ne.s32.totalorder %s232, %s234
      %p238 = scmp.eq.s32.totalorder %s30, 0
      %p239 = por %p237, %p238
      %p240 = scmp.ne.s32.totalorder %s232, %s234
      %p241 = scmp.eq.s32.totalorder %s35, 1
      %p242 = por %p240, %p241
      %p243 = scmp.ne.s32.totalorder %s234, %s235
      %p244 = scmp.eq.s32.totalorder %s35, 0
      %p245 = por %p243, %p244
      %p246 = scmp.ne.s32.totalorder %s234, %s235
      %p247 = scmp.eq.s32.totalorder %s36, 1
      %p248 = por %p246, %p247
      %p250 = scmp.ne.s32.totalorder %s235, %s249
      %p251 = scmp.eq.s32.totalorder %s36, 0
      %p252 = por %p250, %p251
      %s254 = sadd.s32 %s253, 1
      %p257 = scmp.eq.s32.totalorder %s30, 1
      %p258 = scmp.ne.s32.totalorder %s253, %s255
      %p259 = scmp.eq.s32.totalorder %s30, 0
      %p260 = por %p258, %p259
      %p261 = scmp.ne.s32.totalorder %s253, %s255
      %p262 = scmp.eq.s32.totalorder %s35, 1
      %p263 = por %p261, %p262
      %p264 = scmp.ne.s32.totalorder %s255, %s256
      %p265 = scmp.eq.s32.totalorder %s35, 0
      %p266 = por %p264, %p265
      %p267 = scmp.ne.s32.totalorder %s255, %s256
      %p268 = scmp.eq.s32.totalorder %s36, 1
      %p269 = por %p267, %p268
      %p271 = scmp.ne.s32.totalorder %s256, %s270
      %p272 = scmp.eq.s32.totalorder %s36, 0
      %p273 = por %p271, %p272
      %s275 = sadd.s32 %s274, 1
      %p278 = scmp.eq.s32.totalorder %s30, 1
      %p279 = scmp.ne.s32.totalorder %s274, %s276
      %p280 = scmp.eq.s32.totalorder %s30, 0
      %p281 = por %p279, %p280
      %p282 = scmp.ne.s32.totalorder %s274, %s276
      %p283 = scmp.eq.s32.totalorder %s35, 1
      %p284 = por %p282, %p283
      %p285 = scmp.ne.s32.totalorder %s276, %s277
      %p286 = scmp.eq.s32.totalorder %s35, 0
      %p287 = por %p285, %p286
      %p288 = scmp.ne.s32.totalorder %s276, %s277
      %p289 = scmp.eq.s32.totalorder %s36, 1
      %p290 = por %p288, %p289
      %p292 = scmp.ne.s32.totalorder %s277, %s291
      %p293 = scmp.eq.s32.totalorder %s36, 0
      %p294 = por %p292, %p293
      %s296 = sadd.s32 %s295, 1
      %p299 = scmp.eq.s32.totalorder %s30, 1
      %p300 = scmp.ne.s32.totalorder %s295, %s297
      %p301 = scmp.eq.s32.totalorder %s30, 0
      %p302 = por %p300, %p301
      %p303 = scmp.ne.s32.totalorder %s295, %s297
      %p304 = scmp.eq.s32.totalorder %s35, 1
      %p305 = por %p303, %p304
      %p306 = scmp.ne.s32.totalorder %s297, %s298
      %p307 = scmp.eq.s32.totalorder %s35, 0
      %p308 = por %p306, %p307
      %p309 = scmp.ne.s32.totalorder %s297, %s298
      %p310 = scmp.eq.s32.totalorder %s36, 1
      %p311 = por %p309, %p310
      %p313 = scmp.ne.s32.totalorder %s298, %s312
      %p314 = scmp.eq.s32.totalorder %s36, 0
      %p315 = por %p313, %p314
      %s317 = sadd.s32 %s316, 1
      %p320 = scmp.eq.s32.totalorder %s30, 1
      %p321 = scmp.ne.s32.totalorder %s316, %s318
      %p322 = scmp.eq.s32.totalorder %s30, 0
      %p323 = por %p321, %p322
      %p324 = scmp.ne.s32.totalorder %s316, %s318
      %p325 = scmp.eq.s32.totalorder %s35, 1
      %p326 = por %p324, %p325
      %p327 = scmp.ne.s32.totalorder %s318, %s319
      %p328 = scmp.eq.s32.totalorder %s35, 0
      %p329 = por %p327, %p328
      %p330 = scmp.ne.s32.totalorder %s318, %s319
      %p331 = scmp.eq.s32.totalorder %s36, 1
      %p332 = por %p330, %p331
      %p334 = scmp.ne.s32.totalorder %s319, %s333
      %p335 = scmp.eq.s32.totalorder %s36, 0
      %p336 = por %p334, %p335
      %s338 = sadd.s32 %s337, 1
      %p341 = scmp.eq.s32.totalorder %s30, 1
      %p342 = scmp.ne.s32.totalorder %s337, %s339
      %p343 = scmp.eq.s32.totalorder %s30, 0
      %p344 = por %p342, %p343
      %p345 = scmp.ne.s32.totalorder %s337, %s339
      %p346 = scmp.eq.s32.totalorder %s35, 1
      %p347 = por %p345, %p346
      %p348 = scmp.ne.s32.totalorder %s339, %s340
      %p349 = scmp.eq.s32.totalorder %s35, 0
      %p350 = por %p348, %p349
      %p351 = scmp.ne.s32.totalorder %s339, %s340
      %p352 = scmp.eq.s32.totalorder %s36, 1
      %p353 = por %p351, %p352
      %p355 = scmp.ne.s32.totalorder %s340, %s354
      %p356 = scmp.eq.s32.totalorder %s36, 0
      %p357 = por %p355, %p356
      %s359 = sadd.s32 %s358, 1
      %p362 = scmp.eq.s32.totalorder %s30, 1
      %p363 = scmp.ne.s32.totalorder %s358, %s360
      %p364 = scmp.eq.s32.totalorder %s30, 0
      %p365 = por %p363, %p364
      %p366 = scmp.ne.s32.totalorder %s358, %s360
      %p367 = scmp.eq.s32.totalorder %s35, 1
      %p368 = por %p366, %p367
      %p369 = scmp.ne.s32.totalorder %s360, %s361
      %p370 = scmp.eq.s32.totalorder %s35, 0
      %p371 = por %p369, %p370
      %p372 = scmp.ne.s32.totalorder %s360, %s361
      %p373 = scmp.eq.s32.totalorder %s36, 1
      %p374 = por %p372, %p373
      %p376 = scmp.ne.s32.totalorder %s361, %s375
      %p377 = scmp.eq.s32.totalorder %s36, 0
      %p378 = por %p376, %p377
      %s380 = sadd.s32 %s379, 1
      %p383 = scmp.eq.s32.totalorder %s30, 1
      %p384 = scmp.ne.s32.totalorder %s379, %s381
      %p385 = scmp.eq.s32.totalorder %s30, 0
      %p386 = por %p384, %p385
      %p387 = scmp.ne.s32.totalorder %s379, %s381
      %p388 = scmp.eq.s32.totalorder %s35, 1
      %p389 = por %p387, %p388
      %p390 = scmp.ne.s32.totalorder %s381, %s382
      %p391 = scmp.eq.s32.totalorder %s35, 0
      %p392 = por %p390, %p391
      %p393 = scmp.ne.s32.totalorder %s381, %s382
      %p394 = scmp.eq.s32.totalorder %s36, 1
      %p395 = por %p393, %p394
      %p397 = scmp.ne.s32.totalorder %s382, %s396
      %p398 = scmp.eq.s32.totalorder %s36, 0
      %p399 = por %p397, %p398
      %s401 = sadd.s32 %s400, 1
      %p404 = scmp.eq.s32.totalorder %s30, 1
      %p405 = scmp.ne.s32.totalorder %s400, %s402
      %p406 = scmp.eq.s32.totalorder %s30, 0
      %p407 = por %p405, %p406
      %p408 = scmp.ne.s32.totalorder %s400, %s402
      %p409 = scmp.eq.s32.totalorder %s35, 1
      %p410 = por %p408, %p409
      %p411 = scmp.ne.s32.totalorder %s402, %s403
      %p412 = scmp.eq.s32.totalorder %s35, 0
      %p413 = por %p411, %p412
      %p414 = scmp.ne.s32.totalorder %s402, %s403
      %p415 = scmp.eq.s32.totalorder %s36, 1
      %p416 = por %p414, %p415
      %p418 = scmp.ne.s32.totalorder %s403, %s417
      %p419 = scmp.eq.s32.totalorder %s36, 0
      %p420 = por %p418, %p419
      %s422 = sadd.s32 %s421, 1
      %p425 = scmp.eq.s32.totalorder %s30, 1
      %p426 = scmp.ne.s32.totalorder %s421, %s423
      %p427 = scmp.eq.s32.totalorder %s30, 0
      %p428 = por %p426, %p427
      %p429 = scmp.ne.s32.totalorder %s421, %s423
      %p430 = scmp.eq.s32.totalorder %s35, 1
      %p431 = por %p429, %p430
      %p432 = scmp.ne.s32.totalorder %s423, %s424
      %p433 = scmp.eq.s32.totalorder %s35, 0
      %p434 = por %p432, %p433
      %p435 = scmp.ne.s32.totalorder %s423, %s424
      %p436 = scmp.eq.s32.totalorder %s36, 1
      %p437 = por %p435, %p436
      %p439 = scmp.ne.s32.totalorder %s424, %s438
      %p440 = scmp.eq.s32.totalorder %s36, 0
      %p441 = por %p439, %p440
      %s443 = sadd.s32 %s442, 1
      %p446 = scmp.eq.s32.totalorder %s30, 1
      %p447 = scmp.ne.s32.totalorder %s442, %s444
      %p448 = scmp.eq.s32.totalorder %s30, 0
      %p449 = por %p447, %p448
      %p450 = scmp.ne.s32.totalorder %s442, %s444
      %p451 = scmp.eq.s32.totalorder %s35, 1
      %p452 = por %p450, %p451
      %p453 = scmp.ne.s32.totalorder %s444, %s445
      %p454 = scmp.eq.s32.totalorder %s35, 0
      %p455 = por %p453, %p454
      %p456 = scmp.ne.s32.totalorder %s444, %s445
      %p457 = scmp.eq.s32.totalorder %s36, 1
      %p458 = por %p456, %p457
      %p460 = scmp.ne.s32.totalorder %s445, %s459
      %p461 = scmp.eq.s32.totalorder %s36, 0
      %p462 = por %p460, %p461
      %s464 = sadd.s32 %s463, 1
      %p467 = scmp.eq.s32.totalorder %s30, 1
      %p468 = scmp.ne.s32.totalorder %s463, %s465
      %p469 = scmp.eq.s32.totalorder %s30, 0
      %p470 = por %p468, %p469
      %p471 = scmp.ne.s32.totalorder %s463, %s465
      %p472 = scmp.eq.s32.totalorder %s35, 1
      %p473 = por %p471, %p472
      %p474 = scmp.ne.s32.totalorder %s465, %s466
      %p475 = scmp.eq.s32.totalorder %s35, 0
      %p476 = por %p474, %p475
      %p477 = scmp.ne.s32.totalorder %s465, %s466
      %p478 = scmp.eq.s32.totalorder %s36, 1
      %p479 = por %p477, %p478
      %p481 = scmp.ne.s32.totalorder %s466, %s480
      %p482 = scmp.eq.s32.totalorder %s36, 0
      %p483 = por %p481, %p482
      %s484 = ssub.s32 %s30, %s37
      %p485 = scmp.eq.s32.totalorder %s484, 0
      %s487 = sadd.s32 %s486, 1
      %s488 = scalar_select %p485, %s486, %s487
      %p491 = pneg %p485
      %p492 = scmp.eq.s32.totalorder %s30, 1
      %p493 = por %p491, %p492
      %p494 = scmp.ne.s32.totalorder %s486, %s489
      %p495 = scmp.eq.s32.totalorder %s30, 0
      %p496 = por %p494, %p495
      %p497 = scmp.ne.s32.totalorder %s486, %s489
      %p498 = scmp.eq.s32.totalorder %s35, 1
      %p499 = por %p497, %p498
      %p500 = scmp.ne.s32.totalorder %s489, %s490
      %p501 = scmp.eq.s32.totalorder %s35, 0
      %p502 = por %p500, %p501
      %p503 = scmp.ne.s32.totalorder %s489, %s490
      %p504 = scmp.eq.s32.totalorder %s36, 1
      %p505 = por %p503, %p504
      %p507 = scmp.ne.s32.totalorder %s490, %s506
      %p508 = scmp.eq.s32.totalorder %s36, 0
      %p509 = por %p507, %p508
      %p510 = scmp.le.s32.totalorder 1, %s30
      %p511 = scmp.lt.s32.totalorder %s30, 3
      %p512 = pnand %p510, %p511
      %p513 = pneg %p512
      // Predicated region
      $region9: #{cross_intra_encoder_block.1} parent=5 // pred_check
        _
      $region10: #{cross_intra_encoder_block.1} parent=5 // pred_check_branch
        %515 = sbr.rel (%p512) target = $region12
      $region11: #{cross_intra_encoder_block.1} parent=5 // pred_region
        %s516 = ssub.s32 %s30, 1
        // Predicated region
        $region13: #{cross_intra_encoder_block.1} parent=11 // pred_check
          %p517 = pneg %p77
        $region14: #{cross_intra_encoder_block.1} parent=11 // pred_check_branch
          %519 = sbr.rel (%p517) target = $region16
        $region15: #{cross_intra_encoder_block.1} parent=11 // pred_region
          _
        $region16: #{cross_intra_encoder_block.1} parent=11 // pred_fallthru
          _
        // Predicated region
        $region17: #{cross_intra_encoder_block.1} parent=11 // pred_check
          %p520 = pneg %p98
        $region18: #{cross_intra_encoder_block.1} parent=11 // pred_check_branch
          %522 = sbr.rel (%p520) target = $region20
        $region19: #{cross_intra_encoder_block.1} parent=11 // pred_region
          _
        $region20: #{cross_intra_encoder_block.1} parent=11 // pred_fallthru
          _
        // Predicated region
        $region21: #{cross_intra_encoder_block.1} parent=11 // pred_check
          %p523 = pneg %p119
        $region22: #{cross_intra_encoder_block.1} parent=11 // pred_check_branch
          %525 = sbr.rel (%p523) target = $region24
        $region23: #{cross_intra_encoder_block.1} parent=11 // pred_region
          _
        $region24: #{cross_intra_encoder_block.1} parent=11 // pred_fallthru
          _
        // Predicated region
        $region25: #{cross_intra_encoder_block.1} parent=11 // pred_check
          %p526 = pneg %p140
        $region26: #{cross_intra_encoder_block.1} parent=11 // pred_check_branch
          %528 = sbr.rel (%p526) target = $region28
        $region27: #{cross_intra_encoder_block.1} parent=11 // pred_region
          _
        $region28: #{cross_intra_encoder_block.1} parent=11 // pred_fallthru
          _
        // Predicated region
        $region29: #{cross_intra_encoder_block.1} parent=11 // pred_check
          %p529 = pneg %p161
        $region30: #{cross_intra_encoder_block.1} parent=11 // pred_check_branch
          %531 = sbr.rel (%p529) target = $region32
        $region31: #{cross_intra_encoder_block.1} parent=11 // pred_region
          _
        $region32: #{cross_intra_encoder_block.1} parent=11 // pred_fallthru
          _
        // Predicated region
        $region33: #{cross_intra_encoder_block.1} parent=11 // pred_check
          %p532 = pneg %p182
        $region34: #{cross_intra_encoder_block.1} parent=11 // pred_check_branch
          %534 = sbr.rel (%p532) target = $region36
        $region35: #{cross_intra_encoder_block.1} parent=11 // pred_region
          _
        $region36: #{cross_intra_encoder_block.1} parent=11 // pred_fallthru
          _
        // Predicated region
        $region37: #{cross_intra_encoder_block.1} parent=11 // pred_check
          %p535 = pneg %p203
        $region38: #{cross_intra_encoder_block.1} parent=11 // pred_check_branch
          %537 = sbr.rel (%p535) target = $region40
        $region39: #{cross_intra_encoder_block.1} parent=11 // pred_region
          _
        $region40: #{cross_intra_encoder_block.1} parent=11 // pred_fallthru
          _
        // Predicated region
        $region41: #{cross_intra_encoder_block.1} parent=11 // pred_check
          %p538 = pneg %p224
        $region42: #{cross_intra_encoder_block.1} parent=11 // pred_check_branch
          %540 = sbr.rel (%p538) target = $region44
        $region43: #{cross_intra_encoder_block.1} parent=11 // pred_region
          _
        $region44: #{cross_intra_encoder_block.1} parent=11 // pred_fallthru
          _
        // Predicated region
        $region45: #{cross_intra_encoder_block.1} parent=11 // pred_check
          %p541 = pneg %p245
        $region46: #{cross_intra_encoder_block.1} parent=11 // pred_check_branch
          %543 = sbr.rel (%p541) target = $region48
        $region47: #{cross_intra_encoder_block.1} parent=11 // pred_region
          _
        $region48: #{cross_intra_encoder_block.1} parent=11 // pred_fallthru
          _
        // Predicated region
        $region49: #{cross_intra_encoder_block.1} parent=11 // pred_check
          %p544 = pneg %p266
        $region50: #{cross_intra_encoder_block.1} parent=11 // pred_check_branch
          %546 = sbr.rel (%p544) target = $region52
        $region51: #{cross_intra_encoder_block.1} parent=11 // pred_region
          _
        $region52: #{cross_intra_encoder_block.1} parent=11 // pred_fallthru
          _
        // Predicated region
        $region53: #{cross_intra_encoder_block.1} parent=11 // pred_check
          %p547 = pneg %p287
        $region54: #{cross_intra_encoder_block.1} parent=11 // pred_check_branch
          %549 = sbr.rel (%p547) target = $region56
        $region55: #{cross_intra_encoder_block.1} parent=11 // pred_region
          _
        $region56: #{cross_intra_encoder_block.1} parent=11 // pred_fallthru
          _
        // Predicated region
        $region57: #{cross_intra_encoder_block.1} parent=11 // pred_check
          %p550 = pneg %p308
        $region58: #{cross_intra_encoder_block.1} parent=11 // pred_check_branch
          %552 = sbr.rel (%p550) target = $region60
        $region59: #{cross_intra_encoder_block.1} parent=11 // pred_region
          _
        $region60: #{cross_intra_encoder_block.1} parent=11 // pred_fallthru
          _
        // Predicated region
        $region61: #{cross_intra_encoder_block.1} parent=11 // pred_check
          %p553 = pneg %p329
        $region62: #{cross_intra_encoder_block.1} parent=11 // pred_check_branch
          %555 = sbr.rel (%p553) target = $region64
        $region63: #{cross_intra_encoder_block.1} parent=11 // pred_region
          _
        $region64: #{cross_intra_encoder_block.1} parent=11 // pred_fallthru
          _
        // Predicated region
        $region65: #{cross_intra_encoder_block.1} parent=11 // pred_check
          %p556 = pneg %p350
        $region66: #{cross_intra_encoder_block.1} parent=11 // pred_check_branch
          %558 = sbr.rel (%p556) target = $region68
        $region67: #{cross_intra_encoder_block.1} parent=11 // pred_region
          _
        $region68: #{cross_intra_encoder_block.1} parent=11 // pred_fallthru
          _
        // Predicated region
        $region69: #{cross_intra_encoder_block.1} parent=11 // pred_check
          %p559 = pneg %p371
        $region70: #{cross_intra_encoder_block.1} parent=11 // pred_check_branch
          %561 = sbr.rel (%p559) target = $region72
        $region71: #{cross_intra_encoder_block.1} parent=11 // pred_region
          _
        $region72: #{cross_intra_encoder_block.1} parent=11 // pred_fallthru
          _
        // Predicated region
        $region73: #{cross_intra_encoder_block.1} parent=11 // pred_check
          %p562 = pneg %p392
        $region74: #{cross_intra_encoder_block.1} parent=11 // pred_check_branch
          %564 = sbr.rel (%p562) target = $region76
        $region75: #{cross_intra_encoder_block.1} parent=11 // pred_region
          _
        $region76: #{cross_intra_encoder_block.1} parent=11 // pred_fallthru
          _
        // Predicated region
        $region77: #{cross_intra_encoder_block.1} parent=11 // pred_check
          %p565 = pneg %p413
        $region78: #{cross_intra_encoder_block.1} parent=11 // pred_check_branch
          %567 = sbr.rel (%p565) target = $region80
        $region79: #{cross_intra_encoder_block.1} parent=11 // pred_region
          _
        $region80: #{cross_intra_encoder_block.1} parent=11 // pred_fallthru
          _
        // Predicated region
        $region81: #{cross_intra_encoder_block.1} parent=11 // pred_check
          %p568 = pneg %p434
        $region82: #{cross_intra_encoder_block.1} parent=11 // pred_check_branch
          %570 = sbr.rel (%p568) target = $region84
        $region83: #{cross_intra_encoder_block.1} parent=11 // pred_region
          _
        $region84: #{cross_intra_encoder_block.1} parent=11 // pred_fallthru
          _
        // Predicated region
        $region85: #{cross_intra_encoder_block.1} parent=11 // pred_check
          %p571 = pneg %p455
        $region86: #{cross_intra_encoder_block.1} parent=11 // pred_check_branch
          %573 = sbr.rel (%p571) target = $region88
        $region87: #{cross_intra_encoder_block.1} parent=11 // pred_region
          _
        $region88: #{cross_intra_encoder_block.1} parent=11 // pred_fallthru
          _
        // Predicated region
        $region89: #{cross_intra_encoder_block.1} parent=11 // pred_check
          %p574 = pneg %p476
        $region90: #{cross_intra_encoder_block.1} parent=11 // pred_check_branch
          %576 = sbr.rel (%p574) target = $region92
        $region91: #{cross_intra_encoder_block.1} parent=11 // pred_region
          _
        $region92: #{cross_intra_encoder_block.1} parent=11 // pred_fallthru
          _
      $region12: #{cross_intra_encoder_block.1} parent=5 // pred_fallthru
        _
      %p577 = scmp.lt.s32.totalorder %s30, 2
      // Predicated region
      $region93: #{cross_intra_encoder_block.1} parent=5 // pred_check
        %p578 = pneg %p577
      $region94: #{cross_intra_encoder_block.1} parent=5 // pred_check_branch
        %580 = sbr.rel (%p578) target = $region96
      $region95: #{cross_intra_encoder_block.1} parent=5 // pred_region
        // Predicated region
        $region97: #{cross_intra_encoder_block.1} parent=95 // pred_check
          %p581 = pneg %p50
        $region98: #{cross_intra_encoder_block.1} parent=95 // pred_check_branch
          %583 = sbr.rel (%p581) target = $region100
        $region99: #{cross_intra_encoder_block.1} parent=95 // pred_region
          %p584 = scmp.lt.s32.totalorder %s30, 1
          %s585 = scalar_select %p584, %s30, 1
          %s586 = smul.addr %s585, 4
          %s587 = smul.addr %s586, 8
          %s588 = scalar_lea.vmem %s0, %s587
        $region100: #{cross_intra_encoder_block.1} parent=95 // pred_fallthru
          _
      $region96: #{cross_intra_encoder_block.1} parent=5 // pred_fallthru
        _
      %p589 = scmp.le.s32.totalorder 1, %s30
      %p590 = scmp.lt.s32.totalorder %s30, 3
      %p591 = pnand %p589, %p590
      %p592 = pneg %p591
      // Predicated region
      $region101: #{cross_intra_encoder_block.1} parent=5 // pred_check
        _
      $region102: #{cross_intra_encoder_block.1} parent=5 // pred_check_branch
        %594 = sbr.rel (%p591) target = $region104
      $region103: #{cross_intra_encoder_block.1} parent=5 // pred_region
        %s595 = ssub.s32 %s30, 1
        %p596 = scmp.lt.s32.totalorder %s35, 1
        %s597 = scalar_select %p596, %s35, 1
        %s598 = smul.addr %s597, 4
        %s599 = smul.addr %s598, 8
        %s600 = scalar_lea.vmem %s0, %s599
        %p601 = pneg %p56
        %p602 = pneg %p53
        %p603 = pneg %p77
        %p604 = pneg %p74
        %p605 = pneg %p98
        %p606 = pneg %p95
        %p607 = pneg %p119
        %p608 = pneg %p116
        %p609 = pneg %p140
        %p610 = pneg %p137
        %p611 = pneg %p161
        %p612 = pneg %p158
        %p613 = pneg %p182
        %p614 = pneg %p179
        %p615 = pneg %p203
        %p616 = pneg %p200
        %p617 = pneg %p224
        %p618 = pneg %p221
        %p619 = pneg %p245
        %p620 = pneg %p242
        %p621 = pneg %p266
        %p622 = pneg %p263
        %p623 = pneg %p287
        %p624 = pneg %p284
        %p625 = pneg %p308
        %p626 = pneg %p305
        %p627 = pneg %p329
        %p628 = pneg %p326
        %p629 = pneg %p350
        %p630 = pneg %p347
        %p631 = pneg %p371
        %p632 = pneg %p368
        %p633 = pneg %p392
        %p634 = pneg %p389
        %p635 = pneg %p413
        %p636 = pneg %p410
        %p637 = pneg %p434
        %p638 = pneg %p431
        %p639 = pneg %p455
        %p640 = pneg %p452
        %p641 = pneg %p476
        %p642 = pneg %p473
        %p643 = pneg %p502
        %p644 = pneg %p499
        %s645 = sand.u32 %s489, 1
        %s646 = scalar_lea.sflag [#allocation3], %s645
        %s647 = sand.u32 %s489, 1
        %s648 = smul.addr %s647, 32
        %s649 = scalar_lea.vmem [#allocation2], %s648
        %p650 = scmp.lt.s32.totalorder %s35, 1
        %s651 = scalar_select %p650, %s35, 1
        %s652 = smul.addr %s651, 4
        %s653 = smul.addr %s652, 8
        %s654 = scalar_lea.vmem %s0, %s653
        %v655 = vld [vmem:[%s654] sm:$0xff]
        %v656 = vld [vmem:[%s654 + $0x8] sm:$0xff]
        %v657 = vld [vmem:[%s654 + $0x10] sm:$0xff]
        %v658 = vld [vmem:[%s654 + $0x18] sm:$0xff]
        %v659 = vld [vmem:[%s1] sm:$0x1]
        %v660 = vld [vmem:[%s2] sm:$0x1]
        %v661 = vld [vmem:[%s7] sm:$0x1]
        %v662 = vld [vmem:[%s19] sm:$0xff]
        %v663 = vld [vmem:[%s19 + $0x8] sm:$0xff]
        %v664 = vld [vmem:[%s19 + $0x10] sm:$0xff]
        %v665 = vld [vmem:[%s19 + $0x18] sm:$0xff]
        %vm666 = vcmask 261120
        %v667 = vsel %vm666, %v655, 0.0
        %668 = vadd.xlane.f32.xlu0 %v667
        %v669 = vpop.xlane.xlu0 %668
        %v670 = vsel %vm666, %v656, 0.0
        %671 = vadd.xlane.f32.xlu0 %v670
        %v672 = vpop.xlane.xlu0 %671
        %v673 = vsel %vm666, %v657, 0.0
        %674 = vadd.xlane.f32.xlu0 %v673
        %v675 = vpop.xlane.xlu0 %674
        %v676 = vsel %vm666, %v658, 0.0
        %677 = vadd.xlane.f32.xlu0 %v676
        %v678 = vpop.xlane.xlu0 %677
        %v679 = vrcp.pop 32.0
        %v680 = vmul.f32 32.0, %v679
        %v681 = vsub.f32 1.0, %v680
        %v682 = vmul.f32 %v679, %v681
        %v683 = vadd.f32 %v679, %v682
        %vm684 = vweird.f32 %v679
        %v685 = vsel %vm684, %v679, %v683
        %v686 = vmul.f32 %v669, %v685
        %v687 = vmul.f32 %v672, %v685
        %v688 = vmul.f32 %v675, %v685
        %v689 = vmul.f32 %v678, %v685
        %v690 = vsub.f32 %v655, %v686
        %v691 = vsub.f32 %v656, %v687
        %v692 = vsub.f32 %v657, %v688
        %v693 = vsub.f32 %v658, %v689
        %v694 = vmul.f32 %v690, %v690
        %v695 = vmul.f32 %v691, %v691
        %v696 = vmul.f32 %v692, %v692
        %v697 = vmul.f32 %v693, %v693
        %v698 = vsel %vm666, %v694, 0.0
        %699 = vadd.xlane.f32.xlu0 %v698
        %v700 = vpop.xlane.xlu0 %699
        %v701 = vsel %vm666, %v695, 0.0
        %702 = vadd.xlane.f32.xlu0 %v701
        %v703 = vpop.xlane.xlu0 %702
        %v704 = vsel %vm666, %v696, 0.0
        %705 = vadd.xlane.f32.xlu0 %v704
        %v706 = vpop.xlane.xlu0 %705
        %v707 = vsel %vm666, %v697, 0.0
        %708 = vadd.xlane.f32.xlu0 %v707
        %v709 = vpop.xlane.xlu0 %708
        %v710 = vmul.f32 %v700, %v685
        %v711 = vmul.f32 %v703, %v685
        %v712 = vmul.f32 %v706, %v685
        %v713 = vmul.f32 %v709, %v685
        %v714 = vadd.f32 %v710, 1e-05
        %v715 = vadd.f32 %v711, 1e-05
        %v716 = vadd.f32 %v712, 1e-05
        %v717 = vadd.f32 %v713, 1e-05
        %v718 = vrsqrt.pop %v714
        %v719 = vmul.f32 %v718, %v714
        %v720 = vmul.f32 %v719, %v718
        %v721 = vmul.f32 0.5, %v720
        %v722 = vsub.f32 1.5, %v721
        %v723 = vmul.f32 %v718, %v722
        %vm724 = vweird.f32 %v714
        %vm725 = vweird.f32 %v718
        %vm726 = vmor %vm724, %vm725
        %v727 = vsel %vm726, %v718, %v723
        %v728 = vrsqrt.pop %v715
        %v729 = vmul.f32 %v728, %v715
        %v730 = vmul.f32 %v729, %v728
        %v731 = vmul.f32 0.5, %v730
        %v732 = vsub.f32 1.5, %v731
        %v733 = vmul.f32 %v728, %v732
        %vm734 = vweird.f32 %v715
        %vm735 = vweird.f32 %v728
        %vm736 = vmor %vm734, %vm735
        %v737 = vsel %vm736, %v728, %v733
        %v738 = vrsqrt.pop %v716
        %v739 = vmul.f32 %v738, %v716
        %v740 = vmul.f32 %v739, %v738
        %v741 = vmul.f32 0.5, %v740
        %v742 = vsub.f32 1.5, %v741
        %v743 = vmul.f32 %v738, %v742
        %vm744 = vweird.f32 %v716
        %vm745 = vweird.f32 %v738
        %vm746 = vmor %vm744, %vm745
        %v747 = vsel %vm746, %v738, %v743
        %v748 = vrsqrt.pop %v717
        %v749 = vmul.f32 %v748, %v717
        %v750 = vmul.f32 %v749, %v748
        %v751 = vmul.f32 0.5, %v750
        %v752 = vsub.f32 1.5, %v751
        %v753 = vmul.f32 %v748, %v752
        %vm754 = vweird.f32 %v717
        %vm755 = vweird.f32 %v748
        %vm756 = vmor %vm754, %vm755
        %v757 = vsel %vm756, %v748, %v753
        %v758 = vmul.f32 %v690, %v727
        %v759 = vmul.f32 %v691, %v737
        %v760 = vmul.f32 %v692, %v747
        %v761 = vmul.f32 %v693, %v757
        %v763 = vperm.slane %v659, 0
        %v765 = vmul.f32 %v758, %v763
        %v766 = vmul.f32 %v759, %v763
        %v767 = vmul.f32 %v760, %v763
        %v768 = vmul.f32 %v761, %v763
        %v770 = vperm.slane %v660, 0
        %v772 = vadd.f32 %v765, %v770
        %v773 = vadd.f32 %v766, %v770
        %v774 = vadd.f32 %v767, %v770
        %v775 = vadd.f32 %v768, %v770
        %v777 = vperm.slane %v661, 0
        %v779 = vadd.f32 %v655, %v777
        %v780 = vadd.f32 %v656, %v777
        %v781 = vadd.f32 %v657, %v777
        %v782 = vadd.f32 %v658, %v777
        %v783 = vld [vmem:[%s3] sm:$0xff]
        %v784 = vld [vmem:[%s3 + $0x8] sm:$0xff]
        %v785 = vld [vmem:[%s3 + $0x10] sm:$0xff]
        %v786 = vld [vmem:[%s3 + $0x18] sm:$0xff]
        %v788 = vsel %vm666, %v772, 0
        %v791 = vsel %vm666, %v773, 0
        %v794 = vsel %vm666, %v774, 0
        %v797 = vsel %vm666, %v775, 0
        %799 = vmatpush.msra.mxu0 0.0
        %800 = vmatpush.msra.mxu0 0.0
        %801 = vmatpush.msra.mxu0 0.0
        %802 = vmatpush.msra.mxu0 0.0
        %803 = vmatpush.msra.mxu0 0.0
        %804 = vmatpush.msra.mxu0 0.0
        %805 = vmatpush.msra.mxu0 0.0
        %806 = vmatpush.msra.mxu0 0.0
        %807 = vmatpush.msra.mxu0 0.0
        %808 = vmatpush.msra.mxu0 0.0
        %809 = vmatpush.msra.mxu0 0.0
        %810 = vmatpush.msra.mxu0 0.0
        %811 = vmatpush.msra.mxu0 %v786
        %812 = vmatpush.msra.mxu0 %v785
        %813 = vmatpush.msra.mxu0 %v784
        %814 = vmatpush.msra.mxu0 %v783
        %815 = vmatmul.f32.gmra.mxu0 %v788
        %v816 = vpop.f32.mrf.mxu0
        %v817 = vadd.f32 0.0, %v816
        %818 = vmatmul.f32.gmra.mxu0 %v791
        %v819 = vpop.f32.mrf.mxu0
        %v820 = vadd.f32 0.0, %v819
        %821 = vmatmul.f32.gmra.mxu0 %v794
        %v822 = vpop.f32.mrf.mxu0
        %v823 = vadd.f32 0.0, %v822
        %824 = vmatmul.f32.gmra.mxu0 %v797
        %v825 = vpop.f32.mrf.mxu0
        %v826 = vadd.f32 0.0, %v825
        %827 = vdwg.mxu0
        %v828 = vld [vmem:[%s4] sm:$0xff]
        %v829 = vld [vmem:[%s4 + $0x8] sm:$0xff]
        %v830 = vld [vmem:[%s4 + $0x10] sm:$0xff]
        %v831 = vld [vmem:[%s4 + $0x18] sm:$0xff]
        %832 = vmatpush.msra.mxu0 0.0
        %833 = vmatpush.msra.mxu0 0.0
        %834 = vmatpush.msra.mxu0 0.0
        %835 = vmatpush.msra.mxu0 0.0
        %836 = vmatpush.msra.mxu0 0.0
        %837 = vmatpush.msra.mxu0 0.0
        %838 = vmatpush.msra.mxu0 0.0
        %839 = vmatpush.msra.mxu0 0.0
        %840 = vmatpush.msra.mxu0 0.0
        %841 = vmatpush.msra.mxu0 0.0
        %842 = vmatpush.msra.mxu0 0.0
        %843 = vmatpush.msra.mxu0 0.0
        %844 = vmatpush.msra.mxu0 %v831
        %845 = vmatpush.msra.mxu0 %v830
        %846 = vmatpush.msra.mxu0 %v829
        %847 = vmatpush.msra.mxu0 %v828
        %848 = vmatmul.f32.gmra.mxu0 %v788
        %v849 = vpop.f32.mrf.mxu0
        %v850 = vadd.f32 0.0, %v849
        %851 = vmatmul.f32.gmra.mxu0 %v791
        %v852 = vpop.f32.mrf.mxu0
        %v853 = vadd.f32 0.0, %v852
        %854 = vmatmul.f32.gmra.mxu0 %v794
        %v855 = vpop.f32.mrf.mxu0
        %v856 = vadd.f32 0.0, %v855
        %857 = vmatmul.f32.gmra.mxu0 %v797
        %v858 = vpop.f32.mrf.mxu0
        %v859 = vadd.f32 0.0, %v858
        %860 = vdwg.mxu0
        %v861 = vld [vmem:[%s5] sm:$0xff]
        %v862 = vld [vmem:[%s5 + $0x8] sm:$0xff]
        %v863 = vld [vmem:[%s5 + $0x10] sm:$0xff]
        %v864 = vld [vmem:[%s5 + $0x18] sm:$0xff]
        %865 = vmatpush.msra.mxu0 0.0
        %866 = vmatpush.msra.mxu0 0.0
        %867 = vmatpush.msra.mxu0 0.0
        %868 = vmatpush.msra.mxu0 0.0
        %869 = vmatpush.msra.mxu0 0.0
        %870 = vmatpush.msra.mxu0 0.0
        %871 = vmatpush.msra.mxu0 0.0
        %872 = vmatpush.msra.mxu0 0.0
        %873 = vmatpush.msra.mxu0 0.0
        %874 = vmatpush.msra.mxu0 0.0
        %875 = vmatpush.msra.mxu0 0.0
        %876 = vmatpush.msra.mxu0 0.0
        %877 = vmatpush.msra.mxu0 %v864
        %878 = vmatpush.msra.mxu0 %v863
        %879 = vmatpush.msra.mxu0 %v862
        %880 = vmatpush.msra.mxu0 %v861
        %881 = vmatmul.f32.gmra.mxu0 %v788
        %v882 = vpop.f32.mrf.mxu0
        %v883 = vadd.f32 0.0, %v882
        %884 = vmatmul.f32.gmra.mxu0 %v791
        %v885 = vpop.f32.mrf.mxu0
        %v886 = vadd.f32 0.0, %v885
        %887 = vmatmul.f32.gmra.mxu0 %v794
        %v888 = vpop.f32.mrf.mxu0
        %v889 = vadd.f32 0.0, %v888
        %890 = vmatmul.f32.gmra.mxu0 %v797
        %v891 = vpop.f32.mrf.mxu0
        %v892 = vadd.f32 0.0, %v891
        %893 = vdwg.mxu0
        %vm894 = vcmask 130048
        %v896 = vsel %vm894, %v817, 0
        %v899 = vsel %vm894, %v820, 0
        %v902 = vsel %vm894, %v823, 0
        %v905 = vsel %vm894, %v826, 0
        %v908 = vsel %vm894, %v850, 0
        %v911 = vsel %vm894, %v853, 0
        %v914 = vsel %vm894, %v856, 0
        %v917 = vsel %vm894, %v859, 0
        %919 = vmatpush.xpose.msra.mxu0 0.0
        %920 = vmatpush.xpose.msra.mxu0 0.0
        %921 = vmatpush.xpose.msra.mxu0 0.0
        %922 = vmatpush.xpose.msra.mxu0 0.0
        %923 = vmatpush.xpose.msra.mxu0 0.0
        %924 = vmatpush.xpose.msra.mxu0 0.0
        %925 = vmatpush.xpose.msra.mxu0 0.0
        %926 = vmatpush.xpose.msra.mxu0 0.0
        %927 = vmatpush.xpose.msra.mxu0 0.0
        %928 = vmatpush.xpose.msra.mxu0 0.0
        %929 = vmatpush.xpose.msra.mxu0 0.0
        %930 = vmatpush.xpose.msra.mxu0 0.0
        %931 = vmatpush.xpose.msra.mxu0 %v917
        %932 = vmatpush.xpose.msra.mxu0 %v914
        %933 = vmatpush.xpose.msra.mxu0 %v911
        %934 = vmatpush.xpose.msra.mxu0 %v908
        %935 = vmatmul.f32.gmra.mxu0 %v896
        %v936 = vpop.f32.mrf.mxu0
        %v937 = vadd.f32 0.0, %v936
        %938 = vmatmul.f32.gmra.mxu0 %v899
        %v939 = vpop.f32.mrf.mxu0
        %v940 = vadd.f32 0.0, %v939
        %941 = vmatmul.f32.gmra.mxu0 %v902
        %v942 = vpop.f32.mrf.mxu0
        %v943 = vadd.f32 0.0, %v942
        %944 = vmatmul.f32.gmra.mxu0 %v905
        %v945 = vpop.f32.mrf.mxu0
        %v946 = vadd.f32 0.0, %v945
        %947 = vdwg.mxu0
        %v948 = vmul.f32 %v937, 0.25
        %v949 = vmul.f32 %v940, 0.25
        %v950 = vmul.f32 %v943, 0.25
        %v951 = vmul.f32 %v946, 0.25
        %v952 = vadd.f32 %v948, %v662
        %v953 = vadd.f32 %v949, %v663
        %v954 = vadd.f32 %v950, %v664
        %v955 = vadd.f32 %v951, %v665
        %v956 = vsel %vm666, %v952, -inf
        %957 = vmax.xlane.f32.xlu0 %v956
        %v958 = vpop.xlane.xlu0 %957
        %v959 = vsel %vm666, %v953, -inf
        %960 = vmax.xlane.f32.xlu0 %v959
        %v961 = vpop.xlane.xlu0 %960
        %v962 = vsel %vm666, %v954, -inf
        %963 = vmax.xlane.f32.xlu0 %v962
        %v964 = vpop.xlane.xlu0 %963
        %v965 = vsel %vm666, %v955, -inf
        %966 = vmax.xlane.f32.xlu0 %v965
        %v967 = vpop.xlane.xlu0 %966
        %v968 = vsub.f32 %v952, %v958
        %v969 = vsub.f32 %v953, %v961
        %v970 = vsub.f32 %v954, %v964
        %v971 = vsub.f32 %v955, %v967
        %v972 = vmul.f32 %v968, 1.442695
        %v973 = vpow.pop %v972
        %v974 = vmul.f32 %v969, 1.442695
        %v975 = vpow.pop %v974
        %v976 = vmul.f32 %v970, 1.442695
        %v977 = vpow.pop %v976
        %v978 = vmul.f32 %v971, 1.442695
        %v979 = vpow.pop %v978
        %v980 = vsel %vm666, %v973, 0.0
        %981 = vadd.xlane.f32.xlu0 %v980
        %v982 = vpop.xlane.xlu0 %981
        %v983 = vsel %vm666, %v975, 0.0
        %984 = vadd.xlane.f32.xlu0 %v983
        %v985 = vpop.xlane.xlu0 %984
        %v986 = vsel %vm666, %v977, 0.0
        %987 = vadd.xlane.f32.xlu0 %v986
        %v988 = vpop.xlane.xlu0 %987
        %v989 = vsel %vm666, %v979, 0.0
        %990 = vadd.xlane.f32.xlu0 %v989
        %v991 = vpop.xlane.xlu0 %990
        %v992 = vrcp.pop %v982
        %v993 = vrcp.pop %v985
        %v994 = vrcp.pop %v988
        %v995 = vrcp.pop %v991
        %v996 = vmul.f32 %v973, %v992
        %v997 = vmul.f32 %v975, %v993
        %v998 = vmul.f32 %v977, %v994
        %v999 = vmul.f32 %v979, %v995
        %v1001 = vsel %vm666, %v996, 0
        %v1004 = vsel %vm666, %v997, 0
        %v1007 = vsel %vm666, %v998, 0
        %v1010 = vsel %vm666, %v999, 0
        %1012 = vmatpush.msra.mxu0 0.0
        %1013 = vmatpush.msra.mxu0 0.0
        %1014 = vmatpush.msra.mxu0 0.0
        %1015 = vmatpush.msra.mxu0 0.0
        %1016 = vmatpush.msra.mxu0 0.0
        %1017 = vmatpush.msra.mxu0 0.0
        %1018 = vmatpush.msra.mxu0 0.0
        %1019 = vmatpush.msra.mxu0 0.0
        %1020 = vmatpush.msra.mxu0 0.0
        %1021 = vmatpush.msra.mxu0 0.0
        %1022 = vmatpush.msra.mxu0 0.0
        %1023 = vmatpush.msra.mxu0 0.0
        %1024 = vmatpush.msra.mxu0 %v892
        %1025 = vmatpush.msra.mxu0 %v889
        %1026 = vmatpush.msra.mxu0 %v886
        %1027 = vmatpush.msra.mxu0 %v883
        %1028 = vmatmul.f32.gmra.mxu0 %v1001
        %v1029 = vpop.f32.mrf.mxu0
        %v1030 = vadd.f32 0.0, %v1029
        %1031 = vmatmul.f32.gmra.mxu0 %v1004
        %v1032 = vpop.f32.mrf.mxu0
        %v1033 = vadd.f32 0.0, %v1032
        %1034 = vmatmul.f32.gmra.mxu0 %v1007
        %v1035 = vpop.f32.mrf.mxu0
        %v1036 = vadd.f32 0.0, %v1035
        %1037 = vmatmul.f32.gmra.mxu0 %v1010
        %v1038 = vpop.f32.mrf.mxu0
        %v1039 = vadd.f32 0.0, %v1038
        %1040 = vdwg.mxu0
        %v1041 = vld [vmem:[%s6] sm:$0xff]
        %v1042 = vld [vmem:[%s6 + $0x8] sm:$0xff]
        %v1044 = vsel %vm894, %v1030, 0
        %v1047 = vsel %vm894, %v1033, 0
        %v1050 = vsel %vm894, %v1036, 0
        %v1053 = vsel %vm894, %v1039, 0
        %1055 = vmatpush.msra.mxu0 0.0
        %1056 = vmatpush.msra.mxu0 0.0
        %1057 = vmatpush.msra.mxu0 0.0
        %1058 = vmatpush.msra.mxu0 0.0
        %1059 = vmatpush.msra.mxu0 0.0
        %1060 = vmatpush.msra.mxu0 0.0
        %1061 = vmatpush.msra.mxu0 0.0
        %1062 = vmatpush.msra.mxu0 0.0
        %1063 = vmatpush.msra.mxu0 0.0
        %1064 = vmatpush.msra.mxu0 0.0
        %1065 = vmatpush.msra.mxu0 0.0
        %1066 = vmatpush.msra.mxu0 0.0
        %1067 = vmatpush.msra.mxu0 0.0
        %1068 = vmatpush.msra.mxu0 0.0
        %1069 = vmatpush.msra.mxu0 %v1042
        %1070 = vmatpush.msra.mxu0 %v1041
        %1071 = vmatmul.f32.gmra.mxu0 %v1044
        %v1072 = vpop.f32.mrf.mxu0
        %v1073 = vadd.f32 0.0, %v1072
        %1074 = vmatmul.f32.gmra.mxu0 %v1047
        %v1075 = vpop.f32.mrf.mxu0
        %v1076 = vadd.f32 0.0, %v1075
        %1077 = vmatmul.f32.gmra.mxu0 %v1050
        %v1078 = vpop.f32.mrf.mxu0
        %v1079 = vadd.f32 0.0, %v1078
        %1080 = vmatmul.f32.gmra.mxu0 %v1053
        %v1081 = vpop.f32.mrf.mxu0
        %v1082 = vadd.f32 0.0, %v1081
        %1083 = vdwg.mxu0
        %v1084 = vadd.f32 %v779, %v1073
        %v1085 = vadd.f32 %v780, %v1076
        %v1086 = vadd.f32 %v781, %v1079
        %v1087 = vadd.f32 %v782, %v1082
        %s1088 = scalar_lea.vmem %s3, 32
        %v1089 = vld [vmem:[%s1088] sm:$0xff]
        %v1090 = vld [vmem:[%s1088 + $0x8] sm:$0xff]
        %v1091 = vld [vmem:[%s1088 + $0x10] sm:$0xff]
        %v1092 = vld [vmem:[%s1088 + $0x18] sm:$0xff]
        %1093 = vmatpush.msra.mxu0 0.0
        %1094 = vmatpush.msra.mxu0 0.0
        %1095 = vmatpush.msra.mxu0 0.0
        %1096 = vmatpush.msra.mxu0 0.0
        %1097 = vmatpush.msra.mxu0 0.0
        %1098 = vmatpush.msra.mxu0 0.0
        %1099 = vmatpush.msra.mxu0 0.0
        %1100 = vmatpush.msra.mxu0 0.0
        %1101 = vmatpush.msra.mxu0 0.0
        %1102 = vmatpush.msra.mxu0 0.0
        %1103 = vmatpush.msra.mxu0 0.0
        %1104 = vmatpush.msra.mxu0 0.0
        %1105 = vmatpush.msra.mxu0 %v1092
        %1106 = vmatpush.msra.mxu0 %v1091
        %1107 = vmatpush.msra.mxu0 %v1090
        %1108 = vmatpush.msra.mxu0 %v1089
        %1109 = vmatmul.f32.gmra.mxu0 %v788
        %v1110 = vpop.f32.mrf.mxu0
        %v1111 = vadd.f32 0.0, %v1110
        %1112 = vmatmul.f32.gmra.mxu0 %v791
        %v1113 = vpop.f32.mrf.mxu0
        %v1114 = vadd.f32 0.0, %v1113
        %1115 = vmatmul.f32.gmra.mxu0 %v794
        %v1116 = vpop.f32.mrf.mxu0
        %v1117 = vadd.f32 0.0, %v1116
        %1118 = vmatmul.f32.gmra.mxu0 %v797
        %v1119 = vpop.f32.mrf.mxu0
        %v1120 = vadd.f32 0.0, %v1119
        %1121 = vdwg.mxu0
        %s1122 = scalar_lea.vmem %s4, 32
        %v1123 = vld [vmem:[%s1122] sm:$0xff]
        %v1124 = vld [vmem:[%s1122 + $0x8] sm:$0xff]
        %v1125 = vld [vmem:[%s1122 + $0x10] sm:$0xff]
        %v1126 = vld [vmem:[%s1122 + $0x18] sm:$0xff]
        %1127 = vmatpush.msra.mxu0 0.0
        %1128 = vmatpush.msra.mxu0 0.0
        %1129 = vmatpush.msra.mxu0 0.0
        %1130 = vmatpush.msra.mxu0 0.0
        %1131 = vmatpush.msra.mxu0 0.0
        %1132 = vmatpush.msra.mxu0 0.0
        %1133 = vmatpush.msra.mxu0 0.0
        %1134 = vmatpush.msra.mxu0 0.0
        %1135 = vmatpush.msra.mxu0 0.0
        %1136 = vmatpush.msra.mxu0 0.0
        %1137 = vmatpush.msra.mxu0 0.0
        %1138 = vmatpush.msra.mxu0 0.0
        %1139 = vmatpush.msra.mxu0 %v1126
        %1140 = vmatpush.msra.mxu0 %v1125
        %1141 = vmatpush.msra.mxu0 %v1124
        %1142 = vmatpush.msra.mxu0 %v1123
        %1143 = vmatmul.f32.gmra.mxu0 %v788
        %v1144 = vpop.f32.mrf.mxu0
        %v1145 = vadd.f32 0.0, %v1144
        %1146 = vmatmul.f32.gmra.mxu0 %v791
        %v1147 = vpop.f32.mrf.mxu0
        %v1148 = vadd.f32 0.0, %v1147
        %1149 = vmatmul.f32.gmra.mxu0 %v794
        %v1150 = vpop.f32.mrf.mxu0
        %v1151 = vadd.f32 0.0, %v1150
        %1152 = vmatmul.f32.gmra.mxu0 %v797
        %v1153 = vpop.f32.mrf.mxu0
        %v1154 = vadd.f32 0.0, %v1153
        %1155 = vdwg.mxu0
        %s1156 = scalar_lea.vmem %s5, 32
        %v1157 = vld [vmem:[%s1156] sm:$0xff]
        %v1158 = vld [vmem:[%s1156 + $0x8] sm:$0xff]
        %v1159 = vld [vmem:[%s1156 + $0x10] sm:$0xff]
        %v1160 = vld [vmem:[%s1156 + $0x18] sm:$0xff]
        %1161 = vmatpush.msra.mxu0 0.0
        %1162 = vmatpush.msra.mxu0 0.0
        %1163 = vmatpush.msra.mxu0 0.0
        %1164 = vmatpush.msra.mxu0 0.0
        %1165 = vmatpush.msra.mxu0 0.0
        %1166 = vmatpush.msra.mxu0 0.0
        %1167 = vmatpush.msra.mxu0 0.0
        %1168 = vmatpush.msra.mxu0 0.0
        %1169 = vmatpush.msra.mxu0 0.0
        %1170 = vmatpush.msra.mxu0 0.0
        %1171 = vmatpush.msra.mxu0 0.0
        %1172 = vmatpush.msra.mxu0 0.0
        %1173 = vmatpush.msra.mxu0 %v1160
        %1174 = vmatpush.msra.mxu0 %v1159
        %1175 = vmatpush.msra.mxu0 %v1158
        %1176 = vmatpush.msra.mxu0 %v1157
        %1177 = vmatmul.f32.gmra.mxu0 %v788
        %v1178 = vpop.f32.mrf.mxu0
        %v1179 = vadd.f32 0.0, %v1178
        %1180 = vmatmul.f32.gmra.mxu0 %v791
        %v1181 = vpop.f32.mrf.mxu0
        %v1182 = vadd.f32 0.0, %v1181
        %1183 = vmatmul.f32.gmra.mxu0 %v794
        %v1184 = vpop.f32.mrf.mxu0
        %v1185 = vadd.f32 0.0, %v1184
        %1186 = vmatmul.f32.gmra.mxu0 %v797
        %v1187 = vpop.f32.mrf.mxu0
        %v1188 = vadd.f32 0.0, %v1187
        %1189 = vdwg.mxu0
        %v1191 = vsel %vm894, %v1111, 0
        %v1194 = vsel %vm894, %v1114, 0
        %v1197 = vsel %vm894, %v1117, 0
        %v1200 = vsel %vm894, %v1120, 0
        %v1203 = vsel %vm894, %v1145, 0
        %v1206 = vsel %vm894, %v1148, 0
        %v1209 = vsel %vm894, %v1151, 0
        %v1212 = vsel %vm894, %v1154, 0
        %1214 = vmatpush.xpose.msra.mxu0 0.0
        %1215 = vmatpush.xpose.msra.mxu0 0.0
        %1216 = vmatpush.xpose.msra.mxu0 0.0
        %1217 = vmatpush.xpose.msra.mxu0 0.0
        %1218 = vmatpush.xpose.msra.mxu0 0.0
        %1219 = vmatpush.xpose.msra.mxu0 0.0
        %1220 = vmatpush.xpose.msra.mxu0 0.0
        %1221 = vmatpush.xpose.msra.mxu0 0.0
        %1222 = vmatpush.xpose.msra.mxu0 0.0
        %1223 = vmatpush.xpose.msra.mxu0 0.0
        %1224 = vmatpush.xpose.msra.mxu0 0.0
        %1225 = vmatpush.xpose.msra.mxu0 0.0
        %1226 = vmatpush.xpose.msra.mxu0 %v1212
        %1227 = vmatpush.xpose.msra.mxu0 %v1209
        %1228 = vmatpush.xpose.msra.mxu0 %v1206
        %1229 = vmatpush.xpose.msra.mxu0 %v1203
        %1230 = vmatmul.f32.gmra.mxu0 %v1191
        %v1231 = vpop.f32.mrf.mxu0
        %v1232 = vadd.f32 0.0, %v1231
        %1233 = vmatmul.f32.gmra.mxu0 %v1194
        %v1234 = vpop.f32.mrf.mxu0
        %v1235 = vadd.f32 0.0, %v1234
        %1236 = vmatmul.f32.gmra.mxu0 %v1197
        %v1237 = vpop.f32.mrf.mxu0
        %v1238 = vadd.f32 0.0, %v1237
        %1239 = vmatmul.f32.gmra.mxu0 %v1200
        %v1240 = vpop.f32.mrf.mxu0
        %v1241 = vadd.f32 0.0, %v1240
        %1242 = vdwg.mxu0
        %v1243 = vmul.f32 %v1232, 0.25
        %v1244 = vmul.f32 %v1235, 0.25
        %v1245 = vmul.f32 %v1238, 0.25
        %v1246 = vmul.f32 %v1241, 0.25
        %v1247 = vadd.f32 %v1243, %v662
        %v1248 = vadd.f32 %v1244, %v663
        %v1249 = vadd.f32 %v1245, %v664
        %v1250 = vadd.f32 %v1246, %v665
        %v1251 = vsel %vm666, %v1247, -inf
        %1252 = vmax.xlane.f32.xlu0 %v1251
        %v1253 = vpop.xlane.xlu0 %1252
        %v1254 = vsel %vm666, %v1248, -inf
        %1255 = vmax.xlane.f32.xlu0 %v1254
        %v1256 = vpop.xlane.xlu0 %1255
        %v1257 = vsel %vm666, %v1249, -inf
        %1258 = vmax.xlane.f32.xlu0 %v1257
        %v1259 = vpop.xlane.xlu0 %1258
        %v1260 = vsel %vm666, %v1250, -inf
        %1261 = vmax.xlane.f32.xlu0 %v1260
        %v1262 = vpop.xlane.xlu0 %1261
        %v1263 = vsub.f32 %v1247, %v1253
        %v1264 = vsub.f32 %v1248, %v1256
        %v1265 = vsub.f32 %v1249, %v1259
        %v1266 = vsub.f32 %v1250, %v1262
        %v1267 = vmul.f32 %v1263, 1.442695
        %v1268 = vpow.pop %v1267
        %v1269 = vmul.f32 %v1264, 1.442695
        %v1270 = vpow.pop %v1269
        %v1271 = vmul.f32 %v1265, 1.442695
        %v1272 = vpow.pop %v1271
        %v1273 = vmul.f32 %v1266, 1.442695
        %v1274 = vpow.pop %v1273
        %v1275 = vsel %vm666, %v1268, 0.0
        %1276 = vadd.xlane.f32.xlu0 %v1275
        %v1277 = vpop.xlane.xlu0 %1276
        %v1278 = vsel %vm666, %v1270, 0.0
        %1279 = vadd.xlane.f32.xlu0 %v1278
        %v1280 = vpop.xlane.xlu0 %1279
        %v1281 = vsel %vm666, %v1272, 0.0
        %1282 = vadd.xlane.f32.xlu0 %v1281
        %v1283 = vpop.xlane.xlu0 %1282
        %v1284 = vsel %vm666, %v1274, 0.0
        %1285 = vadd.xlane.f32.xlu0 %v1284
        %v1286 = vpop.xlane.xlu0 %1285
        %v1287 = vrcp.pop %v1277
        %v1288 = vrcp.pop %v1280
        %v1289 = vrcp.pop %v1283
        %v1290 = vrcp.pop %v1286
        %v1291 = vmul.f32 %v1268, %v1287
        %v1292 = vmul.f32 %v1270, %v1288
        %v1293 = vmul.f32 %v1272, %v1289
        %v1294 = vmul.f32 %v1274, %v1290
        %v1296 = vsel %vm666, %v1291, 0
        %v1299 = vsel %vm666, %v1292, 0
        %v1302 = vsel %vm666, %v1293, 0
        %v1305 = vsel %vm666, %v1294, 0
        %1307 = vmatpush.msra.mxu0 0.0
        %1308 = vmatpush.msra.mxu0 0.0
        %1309 = vmatpush.msra.mxu0 0.0
        %1310 = vmatpush.msra.mxu0 0.0
        %1311 = vmatpush.msra.mxu0 0.0
        %1312 = vmatpush.msra.mxu0 0.0
        %1313 = vmatpush.msra.mxu0 0.0
        %1314 = vmatpush.msra.mxu0 0.0
        %1315 = vmatpush.msra.mxu0 0.0
        %1316 = vmatpush.msra.mxu0 0.0
        %1317 = vmatpush.msra.mxu0 0.0
        %1318 = vmatpush.msra.mxu0 0.0
        %1319 = vmatpush.msra.mxu0 %v1188
        %1320 = vmatpush.msra.mxu0 %v1185
        %1321 = vmatpush.msra.mxu0 %v1182
        %1322 = vmatpush.msra.mxu0 %v1179
        %1323 = vmatmul.f32.gmra.mxu0 %v1296
        %v1324 = vpop.f32.mrf.mxu0
        %v1325 = vadd.f32 0.0, %v1324
        %1326 = vmatmul.f32.gmra.mxu0 %v1299
        %v1327 = vpop.f32.mrf.mxu0
        %v1328 = vadd.f32 0.0, %v1327
        %1329 = vmatmul.f32.gmra.mxu0 %v1302
        %v1330 = vpop.f32.mrf.mxu0
        %v1331 = vadd.f32 0.0, %v1330
        %1332 = vmatmul.f32.gmra.mxu0 %v1305
        %v1333 = vpop.f32.mrf.mxu0
        %v1334 = vadd.f32 0.0, %v1333
        %1335 = vdwg.mxu0
        %s1336 = scalar_lea.vmem %s6, 16
        %v1337 = vld [vmem:[%s1336] sm:$0xff]
        %v1338 = vld [vmem:[%s1336 + $0x8] sm:$0xff]
        %v1340 = vsel %vm894, %v1325, 0
        %v1343 = vsel %vm894, %v1328, 0
        %v1346 = vsel %vm894, %v1331, 0
        %v1349 = vsel %vm894, %v1334, 0
        %1351 = vmatpush.msra.mxu0 0.0
        %1352 = vmatpush.msra.mxu0 0.0
        %1353 = vmatpush.msra.mxu0 0.0
        %1354 = vmatpush.msra.mxu0 0.0
        %1355 = vmatpush.msra.mxu0 0.0
        %1356 = vmatpush.msra.mxu0 0.0
        %1357 = vmatpush.msra.mxu0 0.0
        %1358 = vmatpush.msra.mxu0 0.0
        %1359 = vmatpush.msra.mxu0 0.0
        %1360 = vmatpush.msra.mxu0 0.0
        %1361 = vmatpush.msra.mxu0 0.0
        %1362 = vmatpush.msra.mxu0 0.0
        %1363 = vmatpush.msra.mxu0 0.0
        %1364 = vmatpush.msra.mxu0 0.0
        %1365 = vmatpush.msra.mxu0 %v1338
        %1366 = vmatpush.msra.mxu0 %v1337
        %1367 = vmatmul.f32.gmra.mxu0 %v1340
        %v1368 = vpop.f32.mrf.mxu0
        %v1369 = vadd.f32 0.0, %v1368
        %1370 = vmatmul.f32.gmra.mxu0 %v1343
        %v1371 = vpop.f32.mrf.mxu0
        %v1372 = vadd.f32 0.0, %v1371
        %1373 = vmatmul.f32.gmra.mxu0 %v1346
        %v1374 = vpop.f32.mrf.mxu0
        %v1375 = vadd.f32 0.0, %v1374
        %1376 = vmatmul.f32.gmra.mxu0 %v1349
        %v1377 = vpop.f32.mrf.mxu0
        %v1378 = vadd.f32 0.0, %v1377
        %1379 = vdwg.mxu0
        %v1380 = vadd.f32 %v1084, %v1369
        %v1381 = vadd.f32 %v1085, %v1372
        %v1382 = vadd.f32 %v1086, %v1375
        %v1383 = vadd.f32 %v1087, %v1378
        %v1384 = vld [vmem:[%s8] sm:$0x1]
        %v1385 = vld [vmem:[%s9] sm:$0x1]
        %v1386 = vld [vmem:[%s14] sm:$0x1]
        %v1387 = vld [vmem:[%s20] sm:$0xff]
        %v1388 = vld [vmem:[%s20 + $0x8] sm:$0xff]
        %v1389 = vld [vmem:[%s20 + $0x10] sm:$0xff]
        %v1390 = vld [vmem:[%s20 + $0x18] sm:$0xff]
        %v1391 = vsel %vm666, %v1380, 0.0
        %1392 = vadd.xlane.f32.xlu0 %v1391
        %v1393 = vpop.xlane.xlu0 %1392
        %v1394 = vsel %vm666, %v1381, 0.0
        %1395 = vadd.xlane.f32.xlu0 %v1394
        %v1396 = vpop.xlane.xlu0 %1395
        %v1397 = vsel %vm666, %v1382, 0.0
        %1398 = vadd.xlane.f32.xlu0 %v1397
        %v1399 = vpop.xlane.xlu0 %1398
        %v1400 = vsel %vm666, %v1383, 0.0
        %1401 = vadd.xlane.f32.xlu0 %v1400
        %v1402 = vpop.xlane.xlu0 %1401
        %v1403 = vmul.f32 %v1393, %v685
        %v1404 = vmul.f32 %v1396, %v685
        %v1405 = vmul.f32 %v1399, %v685
        %v1406 = vmul.f32 %v1402, %v685
        %v1407 = vsub.f32 %v1380, %v1403
        %v1408 = vsub.f32 %v1381, %v1404
        %v1409 = vsub.f32 %v1382, %v1405
        %v1410 = vsub.f32 %v1383, %v1406
        %v1411 = vmul.f32 %v1407, %v1407
        %v1412 = vmul.f32 %v1408, %v1408
        %v1413 = vmul.f32 %v1409, %v1409
        %v1414 = vmul.f32 %v1410, %v1410
        %v1415 = vsel %vm666, %v1411, 0.0
        %1416 = vadd.xlane.f32.xlu0 %v1415
        %v1417 = vpop.xlane.xlu0 %1416
        %v1418 = vsel %vm666, %v1412, 0.0
        %1419 = vadd.xlane.f32.xlu0 %v1418
        %v1420 = vpop.xlane.xlu0 %1419
        %v1421 = vsel %vm666, %v1413, 0.0
        %1422 = vadd.xlane.f32.xlu0 %v1421
        %v1423 = vpop.xlane.xlu0 %1422
        %v1424 = vsel %vm666, %v1414, 0.0
        %1425 = vadd.xlane.f32.xlu0 %v1424
        %v1426 = vpop.xlane.xlu0 %1425
        %v1427 = vmul.f32 %v1417, %v685
        %v1428 = vmul.f32 %v1420, %v685
        %v1429 = vmul.f32 %v1423, %v685
        %v1430 = vmul.f32 %v1426, %v685
        %v1431 = vadd.f32 %v1427, 1e-05
        %v1432 = vadd.f32 %v1428, 1e-05
        %v1433 = vadd.f32 %v1429, 1e-05
        %v1434 = vadd.f32 %v1430, 1e-05
        %v1435 = vrsqrt.pop %v1431
        %v1436 = vmul.f32 %v1435, %v1431
        %v1437 = vmul.f32 %v1436, %v1435
        %v1438 = vmul.f32 0.5, %v1437
        %v1439 = vsub.f32 1.5, %v1438
        %v1440 = vmul.f32 %v1435, %v1439
        %vm1441 = vweird.f32 %v1431
        %vm1442 = vweird.f32 %v1435
        %vm1443 = vmor %vm1441, %vm1442
        %v1444 = vsel %vm1443, %v1435, %v1440
        %v1445 = vrsqrt.pop %v1432
        %v1446 = vmul.f32 %v1445, %v1432
        %v1447 = vmul.f32 %v1446, %v1445
        %v1448 = vmul.f32 0.5, %v1447
        %v1449 = vsub.f32 1.5, %v1448
        %v1450 = vmul.f32 %v1445, %v1449
        %vm1451 = vweird.f32 %v1432
        %vm1452 = vweird.f32 %v1445
        %vm1453 = vmor %vm1451, %vm1452
        %v1454 = vsel %vm1453, %v1445, %v1450
        %v1455 = vrsqrt.pop %v1433
        %v1456 = vmul.f32 %v1455, %v1433
        %v1457 = vmul.f32 %v1456, %v1455
        %v1458 = vmul.f32 0.5, %v1457
        %v1459 = vsub.f32 1.5, %v1458
        %v1460 = vmul.f32 %v1455, %v1459
        %vm1461 = vweird.f32 %v1433
        %vm1462 = vweird.f32 %v1455
        %vm1463 = vmor %vm1461, %vm1462
        %v1464 = vsel %vm1463, %v1455, %v1460
        %v1465 = vrsqrt.pop %v1434
        %v1466 = vmul.f32 %v1465, %v1434
        %v1467 = vmul.f32 %v1466, %v1465
        %v1468 = vmul.f32 0.5, %v1467
        %v1469 = vsub.f32 1.5, %v1468
        %v1470 = vmul.f32 %v1465, %v1469
        %vm1471 = vweird.f32 %v1434
        %vm1472 = vweird.f32 %v1465
        %vm1473 = vmor %vm1471, %vm1472
        %v1474 = vsel %vm1473, %v1465, %v1470
        %v1475 = vmul.f32 %v1407, %v1444
        %v1476 = vmul.f32 %v1408, %v1454
        %v1477 = vmul.f32 %v1409, %v1464
        %v1478 = vmul.f32 %v1410, %v1474
        %v1480 = vperm.slane %v1384, 0
        %v1482 = vmul.f32 %v1475, %v1480
        %v1483 = vmul.f32 %v1476, %v1480
        %v1484 = vmul.f32 %v1477, %v1480
        %v1485 = vmul.f32 %v1478, %v1480
        %v1487 = vperm.slane %v1385, 0
        %v1489 = vadd.f32 %v1482, %v1487
        %v1490 = vadd.f32 %v1483, %v1487
        %v1491 = vadd.f32 %v1484, %v1487
        %v1492 = vadd.f32 %v1485, %v1487
        %v1494 = vperm.slane %v1386, 0
        %v1496 = vadd.f32 %v1380, %v1494
        %v1497 = vadd.f32 %v1381, %v1494
        %v1498 = vadd.f32 %v1382, %v1494
        %v1499 = vadd.f32 %v1383, %v1494
        %v1500 = vld [vmem:[%s10] sm:$0xff]
        %v1501 = vld [vmem:[%s10 + $0x8] sm:$0xff]
        %v1502 = vld [vmem:[%s10 + $0x10] sm:$0xff]
        %v1503 = vld [vmem:[%s10 + $0x18] sm:$0xff]
        %v1505 = vsel %vm666, %v1489, 0
        %v1508 = vsel %vm666, %v1490, 0
        %v1511 = vsel %vm666, %v1491, 0
        %v1514 = vsel %vm666, %v1492, 0
        %1516 = vmatpush.msra.mxu0 0.0
        %1517 = vmatpush.msra.mxu0 0.0
        %1518 = vmatpush.msra.mxu0 0.0
        %1519 = vmatpush.msra.mxu0 0.0
        %1520 = vmatpush.msra.mxu0 0.0
        %1521 = vmatpush.msra.mxu0 0.0
        %1522 = vmatpush.msra.mxu0 0.0
        %1523 = vmatpush.msra.mxu0 0.0
        %1524 = vmatpush.msra.mxu0 0.0
        %1525 = vmatpush.msra.mxu0 0.0
        %1526 = vmatpush.msra.mxu0 0.0
        %1527 = vmatpush.msra.mxu0 0.0
        %1528 = vmatpush.msra.mxu0 %v1503
        %1529 = vmatpush.msra.mxu0 %v1502
        %1530 = vmatpush.msra.mxu0 %v1501
        %1531 = vmatpush.msra.mxu0 %v1500
        %1532 = vmatmul.f32.gmra.mxu0 %v1505
        %v1533 = vpop.f32.mrf.mxu0
        %v1534 = vadd.f32 0.0, %v1533
        %1535 = vmatmul.f32.gmra.mxu0 %v1508
        %v1536 = vpop.f32.mrf.mxu0
        %v1537 = vadd.f32 0.0, %v1536
        %1538 = vmatmul.f32.gmra.mxu0 %v1511
        %v1539 = vpop.f32.mrf.mxu0
        %v1540 = vadd.f32 0.0, %v1539
        %1541 = vmatmul.f32.gmra.mxu0 %v1514
        %v1542 = vpop.f32.mrf.mxu0
        %v1543 = vadd.f32 0.0, %v1542
        %1544 = vdwg.mxu0
        %v1545 = vld [vmem:[%s11] sm:$0xff]
        %v1546 = vld [vmem:[%s11 + $0x8] sm:$0xff]
        %v1547 = vld [vmem:[%s11 + $0x10] sm:$0xff]
        %v1548 = vld [vmem:[%s11 + $0x18] sm:$0xff]
        %1549 = vmatpush.msra.mxu0 0.0
        %1550 = vmatpush.msra.mxu0 0.0
        %1551 = vmatpush.msra.mxu0 0.0
        %1552 = vmatpush.msra.mxu0 0.0
        %1553 = vmatpush.msra.mxu0 0.0
        %1554 = vmatpush.msra.mxu0 0.0
        %1555 = vmatpush.msra.mxu0 0.0
        %1556 = vmatpush.msra.mxu0 0.0
        %1557 = vmatpush.msra.mxu0 0.0
        %1558 = vmatpush.msra.mxu0 0.0
        %1559 = vmatpush.msra.mxu0 0.0
        %1560 = vmatpush.msra.mxu0 0.0
        %1561 = vmatpush.msra.mxu0 %v1548
        %1562 = vmatpush.msra.mxu0 %v1547
        %1563 = vmatpush.msra.mxu0 %v1546
        %1564 = vmatpush.msra.mxu0 %v1545
        %1565 = vmatmul.f32.gmra.mxu0 %v1505
        %v1566 = vpop.f32.mrf.mxu0
        %v1567 = vadd.f32 0.0, %v1566
        %1568 = vmatmul.f32.gmra.mxu0 %v1508
        %v1569 = vpop.f32.mrf.mxu0
        %v1570 = vadd.f32 0.0, %v1569
        %1571 = vmatmul.f32.gmra.mxu0 %v1511
        %v1572 = vpop.f32.mrf.mxu0
        %v1573 = vadd.f32 0.0, %v1572
        %1574 = vmatmul.f32.gmra.mxu0 %v1514
        %v1575 = vpop.f32.mrf.mxu0
        %v1576 = vadd.f32 0.0, %v1575
        %1577 = vdwg.mxu0
        %v1578 = vld [vmem:[%s12] sm:$0xff]
        %v1579 = vld [vmem:[%s12 + $0x8] sm:$0xff]
        %v1580 = vld [vmem:[%s12 + $0x10] sm:$0xff]
        %v1581 = vld [vmem:[%s12 + $0x18] sm:$0xff]
        %1582 = vmatpush.msra.mxu0 0.0
        %1583 = vmatpush.msra.mxu0 0.0
        %1584 = vmatpush.msra.mxu0 0.0
        %1585 = vmatpush.msra.mxu0 0.0
        %1586 = vmatpush.msra.mxu0 0.0
        %1587 = vmatpush.msra.mxu0 0.0
        %1588 = vmatpush.msra.mxu0 0.0
        %1589 = vmatpush.msra.mxu0 0.0
        %1590 = vmatpush.msra.mxu0 0.0
        %1591 = vmatpush.msra.mxu0 0.0
        %1592 = vmatpush.msra.mxu0 0.0
        %1593 = vmatpush.msra.mxu0 0.0
        %1594 = vmatpush.msra.mxu0 %v1581
        %1595 = vmatpush.msra.mxu0 %v1580
        %1596 = vmatpush.msra.mxu0 %v1579
        %1597 = vmatpush.msra.mxu0 %v1578
        %1598 = vmatmul.f32.gmra.mxu0 %v1505
        %v1599 = vpop.f32.mrf.mxu0
        %v1600 = vadd.f32 0.0, %v1599
        %1601 = vmatmul.f32.gmra.mxu0 %v1508
        %v1602 = vpop.f32.mrf.mxu0
        %v1603 = vadd.f32 0.0, %v1602
        %1604 = vmatmul.f32.gmra.mxu0 %v1511
        %v1605 = vpop.f32.mrf.mxu0
        %v1606 = vadd.f32 0.0, %v1605
        %1607 = vmatmul.f32.gmra.mxu0 %v1514
        %v1608 = vpop.f32.mrf.mxu0
        %v1609 = vadd.f32 0.0, %v1608
        %1610 = vdwg.mxu0
        %v1612 = vsel %vm894, %v1534, 0
        %v1615 = vsel %vm894, %v1537, 0
        %v1618 = vsel %vm894, %v1540, 0
        %v1621 = vsel %vm894, %v1543, 0
        %v1624 = vsel %vm894, %v1567, 0
        %v1627 = vsel %vm894, %v1570, 0
        %v1630 = vsel %vm894, %v1573, 0
        %v1633 = vsel %vm894, %v1576, 0
        %1635 = vmatpush.xpose.msra.mxu0 0.0
        %1636 = vmatpush.xpose.msra.mxu0 0.0
        %1637 = vmatpush.xpose.msra.mxu0 0.0
        %1638 = vmatpush.xpose.msra.mxu0 0.0
        %1639 = vmatpush.xpose.msra.mxu0 0.0
        %1640 = vmatpush.xpose.msra.mxu0 0.0
        %1641 = vmatpush.xpose.msra.mxu0 0.0
        %1642 = vmatpush.xpose.msra.mxu0 0.0
        %1643 = vmatpush.xpose.msra.mxu0 0.0
        %1644 = vmatpush.xpose.msra.mxu0 0.0
        %1645 = vmatpush.xpose.msra.mxu0 0.0
        %1646 = vmatpush.xpose.msra.mxu0 0.0
        %1647 = vmatpush.xpose.msra.mxu0 %v1633
        %1648 = vmatpush.xpose.msra.mxu0 %v1630
        %1649 = vmatpush.xpose.msra.mxu0 %v1627
        %1650 = vmatpush.xpose.msra.mxu0 %v1624
        %1651 = vmatmul.f32.gmra.mxu0 %v1612
        %v1652 = vpop.f32.mrf.mxu0
        %v1653 = vadd.f32 0.0, %v1652
        %1654 = vmatmul.f32.gmra.mxu0 %v1615
        %v1655 = vpop.f32.mrf.mxu0
        %v1656 = vadd.f32 0.0, %v1655
        %1657 = vmatmul.f32.gmra.mxu0 %v1618
        %v1658 = vpop.f32.mrf.mxu0
        %v1659 = vadd.f32 0.0, %v1658
        %1660 = vmatmul.f32.gmra.mxu0 %v1621
        %v1661 = vpop.f32.mrf.mxu0
        %v1662 = vadd.f32 0.0, %v1661
        %1663 = vdwg.mxu0
        %v1664 = vmul.f32 %v1653, 0.25
        %v1665 = vmul.f32 %v1656, 0.25
        %v1666 = vmul.f32 %v1659, 0.25
        %v1667 = vmul.f32 %v1662, 0.25
        %v1668 = vadd.f32 %v1664, %v1387
        %v1669 = vadd.f32 %v1665, %v1388
        %v1670 = vadd.f32 %v1666, %v1389
        %v1671 = vadd.f32 %v1667, %v1390
        %v1672 = vsel %vm666, %v1668, -inf
        %1673 = vmax.xlane.f32.xlu0 %v1672
        %v1674 = vpop.xlane.xlu0 %1673
        %v1675 = vsel %vm666, %v1669, -inf
        %1676 = vmax.xlane.f32.xlu0 %v1675
        %v1677 = vpop.xlane.xlu0 %1676
        %v1678 = vsel %vm666, %v1670, -inf
        %1679 = vmax.xlane.f32.xlu0 %v1678
        %v1680 = vpop.xlane.xlu0 %1679
        %v1681 = vsel %vm666, %v1671, -inf
        %1682 = vmax.xlane.f32.xlu0 %v1681
        %v1683 = vpop.xlane.xlu0 %1682
        %v1684 = vsub.f32 %v1668, %v1674
        %v1685 = vsub.f32 %v1669, %v1677
        %v1686 = vsub.f32 %v1670, %v1680
        %v1687 = vsub.f32 %v1671, %v1683
        %v1688 = vmul.f32 %v1684, 1.442695
        %v1689 = vpow.pop %v1688
        %v1690 = vmul.f32 %v1685, 1.442695
        %v1691 = vpow.pop %v1690
        %v1692 = vmul.f32 %v1686, 1.442695
        %v1693 = vpow.pop %v1692
        %v1694 = vmul.f32 %v1687, 1.442695
        %v1695 = vpow.pop %v1694
        %v1696 = vsel %vm666, %v1689, 0.0
        %1697 = vadd.xlane.f32.xlu0 %v1696
        %v1698 = vpop.xlane.xlu0 %1697
        %v1699 = vsel %vm666, %v1691, 0.0
        %1700 = vadd.xlane.f32.xlu0 %v1699
        %v1701 = vpop.xlane.xlu0 %1700
        %v1702 = vsel %vm666, %v1693, 0.0
        %1703 = vadd.xlane.f32.xlu0 %v1702
        %v1704 = vpop.xlane.xlu0 %1703
        %v1705 = vsel %vm666, %v1695, 0.0
        %1706 = vadd.xlane.f32.xlu0 %v1705
        %v1707 = vpop.xlane.xlu0 %1706
        %v1708 = vrcp.pop %v1698
        %v1709 = vrcp.pop %v1701
        %v1710 = vrcp.pop %v1704
        %v1711 = vrcp.pop %v1707
        %v1712 = vmul.f32 %v1689, %v1708
        %v1713 = vmul.f32 %v1691, %v1709
        %v1714 = vmul.f32 %v1693, %v1710
        %v1715 = vmul.f32 %v1695, %v1711
        %v1717 = vsel %vm666, %v1712, 0
        %v1720 = vsel %vm666, %v1713, 0
        %v1723 = vsel %vm666, %v1714, 0
        %v1726 = vsel %vm666, %v1715, 0
        %1728 = vmatpush.msra.mxu0 0.0
        %1729 = vmatpush.msra.mxu0 0.0
        %1730 = vmatpush.msra.mxu0 0.0
        %1731 = vmatpush.msra.mxu0 0.0
        %1732 = vmatpush.msra.mxu0 0.0
        %1733 = vmatpush.msra.mxu0 0.0
        %1734 = vmatpush.msra.mxu0 0.0
        %1735 = vmatpush.msra.mxu0 0.0
        %1736 = vmatpush.msra.mxu0 0.0
        %1737 = vmatpush.msra.mxu0 0.0
        %1738 = vmatpush.msra.mxu0 0.0
        %1739 = vmatpush.msra.mxu0 0.0
        %1740 = vmatpush.msra.mxu0 %v1609
        %1741 = vmatpush.msra.mxu0 %v1606
        %1742 = vmatpush.msra.mxu0 %v1603
        %1743 = vmatpush.msra.mxu0 %v1600
        %1744 = vmatmul.f32.gmra.mxu0 %v1717
        %v1745 = vpop.f32.mrf.mxu0
        %v1746 = vadd.f32 0.0, %v1745
        %1747 = vmatmul.f32.gmra.mxu0 %v1720
        %v1748 = vpop.f32.mrf.mxu0
        %v1749 = vadd.f32 0.0, %v1748
        %1750 = vmatmul.f32.gmra.mxu0 %v1723
        %v1751 = vpop.f32.mrf.mxu0
        %v1752 = vadd.f32 0.0, %v1751
        %1753 = vmatmul.f32.gmra.mxu0 %v1726
        %v1754 = vpop.f32.mrf.mxu0
        %v1755 = vadd.f32 0.0, %v1754
        %1756 = vdwg.mxu0
        %v1757 = vld [vmem:[%s13] sm:$0xff]
        %v1758 = vld [vmem:[%s13 + $0x8] sm:$0xff]
        %v1760 = vsel %vm894, %v1746, 0
        %v1763 = vsel %vm894, %v1749, 0
        %v1766 = vsel %vm894, %v1752, 0
        %v1769 = vsel %vm894, %v1755, 0
        %1771 = vmatpush.msra.mxu0 0.0
        %1772 = vmatpush.msra.mxu0 0.0
        %1773 = vmatpush.msra.mxu0 0.0
        %1774 = vmatpush.msra.mxu0 0.0
        %1775 = vmatpush.msra.mxu0 0.0
        %1776 = vmatpush.msra.mxu0 0.0
        %1777 = vmatpush.msra.mxu0 0.0
        %1778 = vmatpush.msra.mxu0 0.0
        %1779 = vmatpush.msra.mxu0 0.0
        %1780 = vmatpush.msra.mxu0 0.0
        %1781 = vmatpush.msra.mxu0 0.0
        %1782 = vmatpush.msra.mxu0 0.0
        %1783 = vmatpush.msra.mxu0 0.0
        %1784 = vmatpush.msra.mxu0 0.0
        %1785 = vmatpush.msra.mxu0 %v1758
        %1786 = vmatpush.msra.mxu0 %v1757
        %1787 = vmatmul.f32.gmra.mxu0 %v1760
        %v1788 = vpop.f32.mrf.mxu0
        %v1789 = vadd.f32 0.0, %v1788
        %1790 = vmatmul.f32.gmra.mxu0 %v1763
        %v1791 = vpop.f32.mrf.mxu0
        %v1792 = vadd.f32 0.0, %v1791
        %1793 = vmatmul.f32.gmra.mxu0 %v1766
        %v1794 = vpop.f32.mrf.mxu0
        %v1795 = vadd.f32 0.0, %v1794
        %1796 = vmatmul.f32.gmra.mxu0 %v1769
        %v1797 = vpop.f32.mrf.mxu0
        %v1798 = vadd.f32 0.0, %v1797
        %1799 = vdwg.mxu0
        %v1800 = vadd.f32 %v1496, %v1789
        %v1801 = vadd.f32 %v1497, %v1792
        %v1802 = vadd.f32 %v1498, %v1795
        %v1803 = vadd.f32 %v1499, %v1798
        %s1804 = scalar_lea.vmem %s10, 32
        %v1805 = vld [vmem:[%s1804] sm:$0xff]
        %v1806 = vld [vmem:[%s1804 + $0x8] sm:$0xff]
        %v1807 = vld [vmem:[%s1804 + $0x10] sm:$0xff]
        %v1808 = vld [vmem:[%s1804 + $0x18] sm:$0xff]
        %1809 = vmatpush.msra.mxu0 0.0
        %1810 = vmatpush.msra.mxu0 0.0
        %1811 = vmatpush.msra.mxu0 0.0
        %1812 = vmatpush.msra.mxu0 0.0
        %1813 = vmatpush.msra.mxu0 0.0
        %1814 = vmatpush.msra.mxu0 0.0
        %1815 = vmatpush.msra.mxu0 0.0
        %1816 = vmatpush.msra.mxu0 0.0
        %1817 = vmatpush.msra.mxu0 0.0
        %1818 = vmatpush.msra.mxu0 0.0
        %1819 = vmatpush.msra.mxu0 0.0
        %1820 = vmatpush.msra.mxu0 0.0
        %1821 = vmatpush.msra.mxu0 %v1808
        %1822 = vmatpush.msra.mxu0 %v1807
        %1823 = vmatpush.msra.mxu0 %v1806
        %1824 = vmatpush.msra.mxu0 %v1805
        %1825 = vmatmul.f32.gmra.mxu0 %v1505
        %v1826 = vpop.f32.mrf.mxu0
        %v1827 = vadd.f32 0.0, %v1826
        %1828 = vmatmul.f32.gmra.mxu0 %v1508
        %v1829 = vpop.f32.mrf.mxu0
        %v1830 = vadd.f32 0.0, %v1829
        %1831 = vmatmul.f32.gmra.mxu0 %v1511
        %v1832 = vpop.f32.mrf.mxu0
        %v1833 = vadd.f32 0.0, %v1832
        %1834 = vmatmul.f32.gmra.mxu0 %v1514
        %v1835 = vpop.f32.mrf.mxu0
        %v1836 = vadd.f32 0.0, %v1835
        %1837 = vdwg.mxu0
        %s1838 = scalar_lea.vmem %s11, 32
        %v1839 = vld [vmem:[%s1838] sm:$0xff]
        %v1840 = vld [vmem:[%s1838 + $0x8] sm:$0xff]
        %v1841 = vld [vmem:[%s1838 + $0x10] sm:$0xff]
        %v1842 = vld [vmem:[%s1838 + $0x18] sm:$0xff]
        %1843 = vmatpush.msra.mxu0 0.0
        %1844 = vmatpush.msra.mxu0 0.0
        %1845 = vmatpush.msra.mxu0 0.0
        %1846 = vmatpush.msra.mxu0 0.0
        %1847 = vmatpush.msra.mxu0 0.0
        %1848 = vmatpush.msra.mxu0 0.0
        %1849 = vmatpush.msra.mxu0 0.0
        %1850 = vmatpush.msra.mxu0 0.0
        %1851 = vmatpush.msra.mxu0 0.0
        %1852 = vmatpush.msra.mxu0 0.0
        %1853 = vmatpush.msra.mxu0 0.0
        %1854 = vmatpush.msra.mxu0 0.0
        %1855 = vmatpush.msra.mxu0 %v1842
        %1856 = vmatpush.msra.mxu0 %v1841
        %1857 = vmatpush.msra.mxu0 %v1840
        %1858 = vmatpush.msra.mxu0 %v1839
        %1859 = vmatmul.f32.gmra.mxu0 %v1505
        %v1860 = vpop.f32.mrf.mxu0
        %v1861 = vadd.f32 0.0, %v1860
        %1862 = vmatmul.f32.gmra.mxu0 %v1508
        %v1863 = vpop.f32.mrf.mxu0
        %v1864 = vadd.f32 0.0, %v1863
        %1865 = vmatmul.f32.gmra.mxu0 %v1511
        %v1866 = vpop.f32.mrf.mxu0
        %v1867 = vadd.f32 0.0, %v1866
        %1868 = vmatmul.f32.gmra.mxu0 %v1514
        %v1869 = vpop.f32.mrf.mxu0
        %v1870 = vadd.f32 0.0, %v1869
        %1871 = vdwg.mxu0
        %s1872 = scalar_lea.vmem %s12, 32
        %v1873 = vld [vmem:[%s1872] sm:$0xff]
        %v1874 = vld [vmem:[%s1872 + $0x8] sm:$0xff]
        %v1875 = vld [vmem:[%s1872 + $0x10] sm:$0xff]
        %v1876 = vld [vmem:[%s1872 + $0x18] sm:$0xff]
        %1877 = vmatpush.msra.mxu0 0.0
        %1878 = vmatpush.msra.mxu0 0.0
        %1879 = vmatpush.msra.mxu0 0.0
        %1880 = vmatpush.msra.mxu0 0.0
        %1881 = vmatpush.msra.mxu0 0.0
        %1882 = vmatpush.msra.mxu0 0.0
        %1883 = vmatpush.msra.mxu0 0.0
        %1884 = vmatpush.msra.mxu0 0.0
        %1885 = vmatpush.msra.mxu0 0.0
        %1886 = vmatpush.msra.mxu0 0.0
        %1887 = vmatpush.msra.mxu0 0.0
        %1888 = vmatpush.msra.mxu0 0.0
        %1889 = vmatpush.msra.mxu0 %v1876
        %1890 = vmatpush.msra.mxu0 %v1875
        %1891 = vmatpush.msra.mxu0 %v1874
        %1892 = vmatpush.msra.mxu0 %v1873
        %1893 = vmatmul.f32.gmra.mxu0 %v1505
        %v1894 = vpop.f32.mrf.mxu0
        %v1895 = vadd.f32 0.0, %v1894
        %1896 = vmatmul.f32.gmra.mxu0 %v1508
        %v1897 = vpop.f32.mrf.mxu0
        %v1898 = vadd.f32 0.0, %v1897
        %1899 = vmatmul.f32.gmra.mxu0 %v1511
        %v1900 = vpop.f32.mrf.mxu0
        %v1901 = vadd.f32 0.0, %v1900
        %1902 = vmatmul.f32.gmra.mxu0 %v1514
        %v1903 = vpop.f32.mrf.mxu0
        %v1904 = vadd.f32 0.0, %v1903
        %1905 = vdwg.mxu0
        %v1907 = vsel %vm894, %v1827, 0
        %v1910 = vsel %vm894, %v1830, 0
        %v1913 = vsel %vm894, %v1833, 0
        %v1916 = vsel %vm894, %v1836, 0
        %v1919 = vsel %vm894, %v1861, 0
        %v1922 = vsel %vm894, %v1864, 0
        %v1925 = vsel %vm894, %v1867, 0
        %v1928 = vsel %vm894, %v1870, 0
        %1930 = vmatpush.xpose.msra.mxu0 0.0
        %1931 = vmatpush.xpose.msra.mxu0 0.0
        %1932 = vmatpush.xpose.msra.mxu0 0.0
        %1933 = vmatpush.xpose.msra.mxu0 0.0
        %1934 = vmatpush.xpose.msra.mxu0 0.0
        %1935 = vmatpush.xpose.msra.mxu0 0.0
        %1936 = vmatpush.xpose.msra.mxu0 0.0
        %1937 = vmatpush.xpose.msra.mxu0 0.0
        %1938 = vmatpush.xpose.msra.mxu0 0.0
        %1939 = vmatpush.xpose.msra.mxu0 0.0
        %1940 = vmatpush.xpose.msra.mxu0 0.0
        %1941 = vmatpush.xpose.msra.mxu0 0.0
        %1942 = vmatpush.xpose.msra.mxu0 %v1928
        %1943 = vmatpush.xpose.msra.mxu0 %v1925
        %1944 = vmatpush.xpose.msra.mxu0 %v1922
        %1945 = vmatpush.xpose.msra.mxu0 %v1919
        %1946 = vmatmul.f32.gmra.mxu0 %v1907
        %v1947 = vpop.f32.mrf.mxu0
        %v1948 = vadd.f32 0.0, %v1947
        %1949 = vmatmul.f32.gmra.mxu0 %v1910
        %v1950 = vpop.f32.mrf.mxu0
        %v1951 = vadd.f32 0.0, %v1950
        %1952 = vmatmul.f32.gmra.mxu0 %v1913
        %v1953 = vpop.f32.mrf.mxu0
        %v1954 = vadd.f32 0.0, %v1953
        %1955 = vmatmul.f32.gmra.mxu0 %v1916
        %v1956 = vpop.f32.mrf.mxu0
        %v1957 = vadd.f32 0.0, %v1956
        %1958 = vdwg.mxu0
        %v1959 = vmul.f32 %v1948, 0.25
        %v1960 = vmul.f32 %v1951, 0.25
        %v1961 = vmul.f32 %v1954, 0.25
        %v1962 = vmul.f32 %v1957, 0.25
        %v1963 = vadd.f32 %v1959, %v1387
        %v1964 = vadd.f32 %v1960, %v1388
        %v1965 = vadd.f32 %v1961, %v1389
        %v1966 = vadd.f32 %v1962, %v1390
        %v1967 = vsel %vm666, %v1963, -inf
        %1968 = vmax.xlane.f32.xlu0 %v1967
        %v1969 = vpop.xlane.xlu0 %1968
        %v1970 = vsel %vm666, %v1964, -inf
        %1971 = vmax.xlane.f32.xlu0 %v1970
        %v1972 = vpop.xlane.xlu0 %1971
        %v1973 = vsel %vm666, %v1965, -inf
        %1974 = vmax.xlane.f32.xlu0 %v1973
        %v1975 = vpop.xlane.xlu0 %1974
        %v1976 = vsel %vm666, %v1966, -inf
        %1977 = vmax.xlane.f32.xlu0 %v1976
        %v1978 = vpop.xlane.xlu0 %1977
        %v1979 = vsub.f32 %v1963, %v1969
        %v1980 = vsub.f32 %v1964, %v1972
        %v1981 = vsub.f32 %v1965, %v1975
        %v1982 = vsub.f32 %v1966, %v1978
        %v1983 = vmul.f32 %v1979, 1.442695
        %v1984 = vpow.pop %v1983
        %v1985 = vmul.f32 %v1980, 1.442695
        %v1986 = vpow.pop %v1985
        %v1987 = vmul.f32 %v1981, 1.442695
        %v1988 = vpow.pop %v1987
        %v1989 = vmul.f32 %v1982, 1.442695
        %v1990 = vpow.pop %v1989
        %v1991 = vsel %vm666, %v1984, 0.0
        %1992 = vadd.xlane.f32.xlu0 %v1991
        %v1993 = vpop.xlane.xlu0 %1992
        %v1994 = vsel %vm666, %v1986, 0.0
        %1995 = vadd.xlane.f32.xlu0 %v1994
        %v1996 = vpop.xlane.xlu0 %1995
        %v1997 = vsel %vm666, %v1988, 0.0
        %1998 = vadd.xlane.f32.xlu0 %v1997
        %v1999 = vpop.xlane.xlu0 %1998
        %v2000 = vsel %vm666, %v1990, 0.0
        %2001 = vadd.xlane.f32.xlu0 %v2000
        %v2002 = vpop.xlane.xlu0 %2001
        %v2003 = vrcp.pop %v1993
        %v2004 = vrcp.pop %v1996
        %v2005 = vrcp.pop %v1999
        %v2006 = vrcp.pop %v2002
        %v2007 = vmul.f32 %v1984, %v2003
        %v2008 = vmul.f32 %v1986, %v2004
        %v2009 = vmul.f32 %v1988, %v2005
        %v2010 = vmul.f32 %v1990, %v2006
        %v2012 = vsel %vm666, %v2007, 0
        %v2015 = vsel %vm666, %v2008, 0
        %v2018 = vsel %vm666, %v2009, 0
        %v2021 = vsel %vm666, %v2010, 0
        %2023 = vmatpush.msra.mxu0 0.0
        %2024 = vmatpush.msra.mxu0 0.0
        %2025 = vmatpush.msra.mxu0 0.0
        %2026 = vmatpush.msra.mxu0 0.0
        %2027 = vmatpush.msra.mxu0 0.0
        %2028 = vmatpush.msra.mxu0 0.0
        %2029 = vmatpush.msra.mxu0 0.0
        %2030 = vmatpush.msra.mxu0 0.0
        %2031 = vmatpush.msra.mxu0 0.0
        %2032 = vmatpush.msra.mxu0 0.0
        %2033 = vmatpush.msra.mxu0 0.0
        %2034 = vmatpush.msra.mxu0 0.0
        %2035 = vmatpush.msra.mxu0 %v1904
        %2036 = vmatpush.msra.mxu0 %v1901
        %2037 = vmatpush.msra.mxu0 %v1898
        %2038 = vmatpush.msra.mxu0 %v1895
        %2039 = vmatmul.f32.gmra.mxu0 %v2012
        %v2040 = vpop.f32.mrf.mxu0
        %v2041 = vadd.f32 0.0, %v2040
        %2042 = vmatmul.f32.gmra.mxu0 %v2015
        %v2043 = vpop.f32.mrf.mxu0
        %v2044 = vadd.f32 0.0, %v2043
        %2045 = vmatmul.f32.gmra.mxu0 %v2018
        %v2046 = vpop.f32.mrf.mxu0
        %v2047 = vadd.f32 0.0, %v2046
        %2048 = vmatmul.f32.gmra.mxu0 %v2021
        %v2049 = vpop.f32.mrf.mxu0
        %v2050 = vadd.f32 0.0, %v2049
        %2051 = vdwg.mxu0
        %s2052 = scalar_lea.vmem %s13, 16
        %v2053 = vld [vmem:[%s2052] sm:$0xff]
        %v2054 = vld [vmem:[%s2052 + $0x8] sm:$0xff]
        %v2056 = vsel %vm894, %v2041, 0
        %v2059 = vsel %vm894, %v2044, 0
        %v2062 = vsel %vm894, %v2047, 0
        %v2065 = vsel %vm894, %v2050, 0
        %2067 = vmatpush.msra.mxu0 0.0
        %2068 = vmatpush.msra.mxu0 0.0
        %2069 = vmatpush.msra.mxu0 0.0
        %2070 = vmatpush.msra.mxu0 0.0
        %2071 = vmatpush.msra.mxu0 0.0
        %2072 = vmatpush.msra.mxu0 0.0
        %2073 = vmatpush.msra.mxu0 0.0
        %2074 = vmatpush.msra.mxu0 0.0
        %2075 = vmatpush.msra.mxu0 0.0
        %2076 = vmatpush.msra.mxu0 0.0
        %2077 = vmatpush.msra.mxu0 0.0
        %2078 = vmatpush.msra.mxu0 0.0
        %2079 = vmatpush.msra.mxu0 0.0
        %2080 = vmatpush.msra.mxu0 0.0
        %2081 = vmatpush.msra.mxu0 %v2054
        %2082 = vmatpush.msra.mxu0 %v2053
        %2083 = vmatmul.f32.gmra.mxu0 %v2056
        %v2084 = vpop.f32.mrf.mxu0
        %v2085 = vadd.f32 0.0, %v2084
        %2086 = vmatmul.f32.gmra.mxu0 %v2059
        %v2087 = vpop.f32.mrf.mxu0
        %v2088 = vadd.f32 0.0, %v2087
        %2089 = vmatmul.f32.gmra.mxu0 %v2062
        %v2090 = vpop.f32.mrf.mxu0
        %v2091 = vadd.f32 0.0, %v2090
        %2092 = vmatmul.f32.gmra.mxu0 %v2065
        %v2093 = vpop.f32.mrf.mxu0
        %v2094 = vadd.f32 0.0, %v2093
        %2095 = vdwg.mxu0
        %v2096 = vadd.f32 %v1800, %v2085
        %v2097 = vadd.f32 %v1801, %v2088
        %v2098 = vadd.f32 %v1802, %v2091
        %v2099 = vadd.f32 %v1803, %v2094
        %v2100 = vld [vmem:[%s15] sm:$0xff]
        %v2101 = vld [vmem:[%s15 + $0x8] sm:$0xff]
        %v2102 = vld [vmem:[%s15 + $0x10] sm:$0xff]
        %v2103 = vld [vmem:[%s15 + $0x18] sm:$0xff]
        %v2104 = vld [vmem:[%s16] sm:$0x1]
        %v2106 = vperm.slane %v2104, 0
        %v2109 = vsel %vm666, %v2096, 0
        %v2112 = vsel %vm666, %v2097, 0
        %v2115 = vsel %vm666, %v2098, 0
        %v2118 = vsel %vm666, %v2099, 0
        %2120 = vmatpush.msra.mxu0 0.0
        %2121 = vmatpush.msra.mxu0 0.0
        %2122 = vmatpush.msra.mxu0 0.0
        %2123 = vmatpush.msra.mxu0 0.0
        %2124 = vmatpush.msra.mxu0 0.0
        %2125 = vmatpush.msra.mxu0 0.0
        %2126 = vmatpush.msra.mxu0 0.0
        %2127 = vmatpush.msra.mxu0 0.0
        %2128 = vmatpush.msra.mxu0 0.0
        %2129 = vmatpush.msra.mxu0 0.0
        %2130 = vmatpush.msra.mxu0 0.0
        %2131 = vmatpush.msra.mxu0 0.0
        %2132 = vmatpush.msra.mxu0 %v2103
        %2133 = vmatpush.msra.mxu0 %v2102
        %2134 = vmatpush.msra.mxu0 %v2101
        %2135 = vmatpush.msra.mxu0 %v2100
        %2136 = vmatmul.f32.gmra.mxu0 %v2109
        %v2137 = vpop.f32.mrf.mxu0
        %v2138 = vadd.f32 %v2106, %v2137
        %2139 = vmatmul.f32.gmra.mxu0 %v2112
        %v2140 = vpop.f32.mrf.mxu0
        %v2141 = vadd.f32 %v2106, %v2140
        %2142 = vmatmul.f32.gmra.mxu0 %v2115
        %v2143 = vpop.f32.mrf.mxu0
        %v2144 = vadd.f32 %v2106, %v2143
        %2145 = vmatmul.f32.gmra.mxu0 %v2118
        %v2146 = vpop.f32.mrf.mxu0
        %v2147 = vadd.f32 %v2106, %v2146
        %2148 = vdwg.mxu0
        %v2149 = vmul.f32 %v2138, 0.5
        %v2150 = vmul.f32 %v2141, 0.5
        %v2151 = vmul.f32 %v2144, 0.5
        %v2152 = vmul.f32 %v2147, 0.5
        %v2153 = vmul.f32 %v2138, 0.70710677
        %v2154 = vmul.f32 %v2141, 0.70710677
        %v2155 = vmul.f32 %v2144, 0.70710677
        %v2156 = vmul.f32 %v2147, 0.70710677
        %v2157 = vmul.f32 %v2153, %v2153
        %v2158 = vmin.f32 16.0, %v2157
        %v2159 = vmul.f32 %v2158, 2.1237322e-06
        %v2160 = vadd.f32 %v2159, 0.00028619796
        %v2161 = vmul.f32 %v2158, %v2160
        %v2162 = vadd.f32 %v2161, 0.0036580483
        %v2163 = vmul.f32 %v2158, %v2162
        %v2164 = vadd.f32 %v2163, 0.05243302
        %v2165 = vmul.f32 %v2158, %v2164
        %v2166 = vadd.f32 %v2165, 0.18741608
        %v2167 = vmul.f32 %v2158, %v2166
        %v2168 = vadd.f32 %v2167, 1.1283791
        %v2169 = vmul.f32 %v2153, %v2168
        %v2170 = vmul.f32 %v2158, 3.8918573e-05
        %v2171 = vadd.f32 %v2170, 0.001143296
        %v2172 = vmul.f32 %v2158, %v2171
        %v2173 = vadd.f32 %v2172, 0.014752088
        %v2174 = vmul.f32 %v2158, %v2173
        %v2175 = vadd.f32 %v2174, 0.112945676
        %v2176 = vmul.f32 %v2158, %v2175
        %v2177 = vadd.f32 %v2176, 0.4994258
        %v2178 = vmul.f32 %v2158, %v2177
        %v2179 = vadd.f32 %v2178, 1.0
        %v2180 = vrcp.pop %v2179
        %v2181 = vmul.f32 %v2179, %v2180
        %v2182 = vsub.f32 1.0, %v2181
        %v2183 = vmul.f32 %v2180, %v2182
        %v2184 = vadd.f32 %v2180, %v2183
        %vm2185 = vweird.f32 %v2179
        %vm2186 = vweird.f32 %v2180
        %vm2187 = vmor %vm2185, %vm2186
        %v2188 = vsel %vm2187, %v2180, %v2184
        %v2189 = vand.u32 2147483647, %v2179
        %vm2190 = vcmp.eq.f32.partialorder %v2189, 8.507059e+37
        %v2191 = vand.u32 %v2179, 2147483648
        %v2192 = vor.u32 1.1754944e-38, %v2191
        %v2193 = vsel %vm2190, %v2192, %v2188
        %v2194 = vmul.f32 %v2169, %v2193
        %v2195 = vmin.f32 %v2194, 1.0
        %v2196 = vmax.f32 %v2195, -1.0
        %v2197 = vmul.f32 %v2154, %v2154
        %v2198 = vmin.f32 16.0, %v2197
        %v2199 = vmul.f32 %v2198, 2.1237322e-06
        %v2200 = vadd.f32 %v2199, 0.00028619796
        %v2201 = vmul.f32 %v2198, %v2200
        %v2202 = vadd.f32 %v2201, 0.0036580483
        %v2203 = vmul.f32 %v2198, %v2202
        %v2204 = vadd.f32 %v2203, 0.05243302
        %v2205 = vmul.f32 %v2198, %v2204
        %v2206 = vadd.f32 %v2205, 0.18741608
        %v2207 = vmul.f32 %v2198, %v2206
        %v2208 = vadd.f32 %v2207, 1.1283791
        %v2209 = vmul.f32 %v2154, %v2208
        %v2210 = vmul.f32 %v2198, 3.8918573e-05
        %v2211 = vadd.f32 %v2210, 0.001143296
        %v2212 = vmul.f32 %v2198, %v2211
        %v2213 = vadd.f32 %v2212, 0.014752088
        %v2214 = vmul.f32 %v2198, %v2213
        %v2215 = vadd.f32 %v2214, 0.112945676
        %v2216 = vmul.f32 %v2198, %v2215
        %v2217 = vadd.f32 %v2216, 0.4994258
        %v2218 = vmul.f32 %v2198, %v2217
        %v2219 = vadd.f32 %v2218, 1.0
        %v2220 = vrcp.pop %v2219
        %v2221 = vmul.f32 %v2219, %v2220
        %v2222 = vsub.f32 1.0, %v2221
        %v2223 = vmul.f32 %v2220, %v2222
        %v2224 = vadd.f32 %v2220, %v2223
        %vm2225 = vweird.f32 %v2219
        %vm2226 = vweird.f32 %v2220
        %vm2227 = vmor %vm2225, %vm2226
        %v2228 = vsel %vm2227, %v2220, %v2224
        %v2229 = vand.u32 2147483647, %v2219
        %vm2230 = vcmp.eq.f32.partialorder %v2229, 8.507059e+37
        %v2231 = vand.u32 %v2219, 2147483648
        %v2232 = vor.u32 1.1754944e-38, %v2231
        %v2233 = vsel %vm2230, %v2232, %v2228
        %v2234 = vmul.f32 %v2209, %v2233
        %v2235 = vmin.f32 %v2234, 1.0
        %v2236 = vmax.f32 %v2235, -1.0
        %v2237 = vmul.f32 %v2155, %v2155
        %v2238 = vmin.f32 16.0, %v2237
        %v2239 = vmul.f32 %v2238, 2.1237322e-06
        %v2240 = vadd.f32 %v2239, 0.00028619796
        %v2241 = vmul.f32 %v2238, %v2240
        %v2242 = vadd.f32 %v2241, 0.0036580483
        %v2243 = vmul.f32 %v2238, %v2242
        %v2244 = vadd.f32 %v2243, 0.05243302
        %v2245 = vmul.f32 %v2238, %v2244
        %v2246 = vadd.f32 %v2245, 0.18741608
        %v2247 = vmul.f32 %v2238, %v2246
        %v2248 = vadd.f32 %v2247, 1.1283791
        %v2249 = vmul.f32 %v2155, %v2248
        %v2250 = vmul.f32 %v2238, 3.8918573e-05
        %v2251 = vadd.f32 %v2250, 0.001143296
        %v2252 = vmul.f32 %v2238, %v2251
        %v2253 = vadd.f32 %v2252, 0.014752088
        %v2254 = vmul.f32 %v2238, %v2253
        %v2255 = vadd.f32 %v2254, 0.112945676
        %v2256 = vmul.f32 %v2238, %v2255
        %v2257 = vadd.f32 %v2256, 0.4994258
        %v2258 = vmul.f32 %v2238, %v2257
        %v2259 = vadd.f32 %v2258, 1.0
        %v2260 = vrcp.pop %v2259
        %v2261 = vmul.f32 %v2259, %v2260
        %v2262 = vsub.f32 1.0, %v2261
        %v2263 = vmul.f32 %v2260, %v2262
        %v2264 = vadd.f32 %v2260, %v2263
        %vm2265 = vweird.f32 %v2259
        %vm2266 = vweird.f32 %v2260
        %vm2267 = vmor %vm2265, %vm2266
        %v2268 = vsel %vm2267, %v2260, %v2264
        %v2269 = vand.u32 2147483647, %v2259
        %vm2270 = vcmp.eq.f32.partialorder %v2269, 8.507059e+37
        %v2271 = vand.u32 %v2259, 2147483648
        %v2272 = vor.u32 1.1754944e-38, %v2271
        %v2273 = vsel %vm2270, %v2272, %v2268
        %v2274 = vmul.f32 %v2249, %v2273
        %v2275 = vmin.f32 %v2274, 1.0
        %v2276 = vmax.f32 %v2275, -1.0
        %v2277 = vmul.f32 %v2156, %v2156
        %v2278 = vmin.f32 16.0, %v2277
        %v2279 = vmul.f32 %v2278, 2.1237322e-06
        %v2280 = vadd.f32 %v2279, 0.00028619796
        %v2281 = vmul.f32 %v2278, %v2280
        %v2282 = vadd.f32 %v2281, 0.0036580483
        %v2283 = vmul.f32 %v2278, %v2282
        %v2284 = vadd.f32 %v2283, 0.05243302
        %v2285 = vmul.f32 %v2278, %v2284
        %v2286 = vadd.f32 %v2285, 0.18741608
        %v2287 = vmul.f32 %v2278, %v2286
        %v2288 = vadd.f32 %v2287, 1.1283791
        %v2289 = vmul.f32 %v2156, %v2288
        %v2290 = vmul.f32 %v2278, 3.8918573e-05
        %v2291 = vadd.f32 %v2290, 0.001143296
        %v2292 = vmul.f32 %v2278, %v2291
        %v2293 = vadd.f32 %v2292, 0.014752088
        %v2294 = vmul.f32 %v2278, %v2293
        %v2295 = vadd.f32 %v2294, 0.112945676
        %v2296 = vmul.f32 %v2278, %v2295
        %v2297 = vadd.f32 %v2296, 0.4994258
        %v2298 = vmul.f32 %v2278, %v2297
        %v2299 = vadd.f32 %v2298, 1.0
        %v2300 = vrcp.pop %v2299
        %v2301 = vmul.f32 %v2299, %v2300
        %v2302 = vsub.f32 1.0, %v2301
        %v2303 = vmul.f32 %v2300, %v2302
        %v2304 = vadd.f32 %v2300, %v2303
        %vm2305 = vweird.f32 %v2299
        %vm2306 = vweird.f32 %v2300
        %vm2307 = vmor %vm2305, %vm2306
        %v2308 = vsel %vm2307, %v2300, %v2304
        %v2309 = vand.u32 2147483647, %v2299
        %vm2310 = vcmp.eq.f32.partialorder %v2309, 8.507059e+37
        %v2311 = vand.u32 %v2299, 2147483648
        %v2312 = vor.u32 1.1754944e-38, %v2311
        %v2313 = vsel %vm2310, %v2312, %v2308
        %v2314 = vmul.f32 %v2289, %v2313
        %v2315 = vmin.f32 %v2314, 1.0
        %v2316 = vmax.f32 %v2315, -1.0
        %v2317 = vadd.f32 %v2196, 1.0
        %v2318 = vadd.f32 %v2236, 1.0
        %v2319 = vadd.f32 %v2276, 1.0
        %v2320 = vadd.f32 %v2316, 1.0
        %v2321 = vmul.f32 %v2149, %v2317
        %v2322 = vmul.f32 %v2150, %v2318
        %v2323 = vmul.f32 %v2151, %v2319
        %v2324 = vmul.f32 %v2152, %v2320
        %v2325 = vld [vmem:[%s17] sm:$0xff]
        %v2326 = vld [vmem:[%s17 + $0x8] sm:$0xff]
        %v2327 = vld [vmem:[%s17 + $0x10] sm:$0xff]
        %v2328 = vld [vmem:[%s17 + $0x18] sm:$0xff]
        %v2329 = vld [vmem:[%s17 + $0x20] sm:$0xff]
        %v2330 = vld [vmem:[%s17 + $0x28] sm:$0xff]
        %v2331 = vld [vmem:[%s17 + $0x30] sm:$0xff]
        %v2332 = vld [vmem:[%s17 + $0x38] sm:$0xff]
        %v2333 = vld [vmem:[%s18] sm:$0x1]
        %v2335 = vperm.slane %v2333, 0
        %vm2337 = vcmask 523264
        %v2339 = vsel %vm2337, %v2321, 0
        %v2342 = vsel %vm2337, %v2322, 0
        %v2345 = vsel %vm2337, %v2323, 0
        %v2348 = vsel %vm2337, %v2324, 0
        %2350 = vmatpush.msra.mxu0 0.0
        %2351 = vmatpush.msra.mxu0 0.0
        %2352 = vmatpush.msra.mxu0 0.0
        %2353 = vmatpush.msra.mxu0 0.0
        %2354 = vmatpush.msra.mxu0 0.0
        %2355 = vmatpush.msra.mxu0 0.0
        %2356 = vmatpush.msra.mxu0 0.0
        %2357 = vmatpush.msra.mxu0 0.0
        %2358 = vmatpush.msra.mxu0 %v2332
        %2359 = vmatpush.msra.mxu0 %v2331
        %2360 = vmatpush.msra.mxu0 %v2330
        %2361 = vmatpush.msra.mxu0 %v2329
        %2362 = vmatpush.msra.mxu0 %v2328
        %2363 = vmatpush.msra.mxu0 %v2327
        %2364 = vmatpush.msra.mxu0 %v2326
        %2365 = vmatpush.msra.mxu0 %v2325
        %2366 = vmatmul.f32.gmra.mxu0 %v2339
        %v2367 = vpop.f32.mrf.mxu0
        %v2368 = vadd.f32 %v2335, %v2367
        %2369 = vmatmul.f32.gmra.mxu0 %v2342
        %v2370 = vpop.f32.mrf.mxu0
        %v2371 = vadd.f32 %v2335, %v2370
        %2372 = vmatmul.f32.gmra.mxu0 %v2345
        %v2373 = vpop.f32.mrf.mxu0
        %v2374 = vadd.f32 %v2335, %v2373
        %2375 = vmatmul.f32.gmra.mxu0 %v2348
        %v2376 = vpop.f32.mrf.mxu0
        %v2377 = vadd.f32 %v2335, %v2376
        %2378 = vdwg.mxu0
        %v2379 = vadd.f32 %v2368, %v2096
        %v2380 = vadd.f32 %v2371, %v2097
        %v2381 = vadd.f32 %v2374, %v2098
        %v2382 = vadd.f32 %v2377, %v2099
        %2383 = vst.msk [vmem:[%s649] sm:$0xff] %vm666, %v2379
        %2384 = vst.msk [vmem:[%s649 + $0x8] sm:$0xff] %vm666, %v2380
        %2385 = vst.msk [vmem:[%s649 + $0x10] sm:$0xff] %vm666, %v2381
        %2386 = vst.msk [vmem:[%s649 + $0x18] sm:$0xff] %vm666, %v2382
        %s2387 = sand.u32 %s489, 1
        %s2388 = scalar_lea.sflag [#allocation3], %s2387
        %s2389 = sand.u32 %s489, 1
        %s2390 = smul.addr %s2389, 32
        %s2391 = scalar_lea.vmem [#allocation2], %s2390
        // Predicated region
        $region105: #{cross_intra_encoder_block.1} parent=103 // pred_check
          %p2392 = pneg %p499
        $region106: #{cross_intra_encoder_block.1} parent=103 // pred_check_branch
          %2394 = sbr.rel (%p2392) target = $region108
        $region107: #{cross_intra_encoder_block.1} parent=103 // pred_region
          %2396 = vsyncadd %s2388, 0
          %s2397 = smul.addr %s35, 4
          %s2398 = smul.addr %s2397, 8
          %s2399 = scalar_lea.hbm %s21, %s2398
          %s2400 = sshll.u32 %s2391, 4
          %s2401 = int_to_ptr.vmem [resolvable:$true] %s2400
          %s2402 = sshll.u32 %s2399, 4
          %s2403 = int_to_ptr.hbm [resolvable:$true] %s2402
          %2408 = dma.vmem_to_hbm [thread:$0]  %s2401, 512, %s2403, %s2388, 128, 128, 8
        $region108: #{cross_intra_encoder_block.1} parent=103 // pred_fallthru
          _
      $region104: #{cross_intra_encoder_block.1} parent=5 // pred_fallthru
        _
      %p2409 = scmp.le.s32.totalorder 2, %s30
      // Predicated region
      $region109: #{cross_intra_encoder_block.1} parent=5 // pred_check
        %p2410 = pneg %p2409
      $region110: #{cross_intra_encoder_block.1} parent=5 // pred_check_branch
        %2412 = sbr.rel (%p2410) target = $region112
      $region111: #{cross_intra_encoder_block.1} parent=5 // pred_region
        %s2413 = ssub.s32 %s30, 2
        // Predicated region
        $region113: #{cross_intra_encoder_block.1} parent=111 // pred_check
          %p2414 = pneg %p505
        $region114: #{cross_intra_encoder_block.1} parent=111 // pred_check_branch
          %2416 = sbr.rel (%p2414) target = $region116
        $region115: #{cross_intra_encoder_block.1} parent=111 // pred_region
          %s2417 = sand.u32 %s490, 1
          %s2418 = scalar_lea.sflag [#allocation3], %s2417
          %s2419 = sand.u32 %s490, 1
          %s2420 = smul.addr %s2419, 32
          %s2421 = scalar_lea.vmem [#allocation2], %s2420
          %2423 = dma.done %s2418, 512
        $region116: #{cross_intra_encoder_block.1} parent=111 // pred_fallthru
          _
      $region112: #{cross_intra_encoder_block.1} parent=5 // pred_fallthru
        _
    $region6: #{cross_intra_encoder_block.1} parent=1 // loop_footer
      %s34 = sadd.s32 1, %s30
    $region7: #{cross_intra_encoder_block.1} parent=1 // loop_footer_branch
      %29 = sbr.rel target = $region3
    $region8: #{cross_intra_encoder_block.1} parent=1 // loop_exit
      _
    %2424 = vsyncpa [#allocation3], 1
    %s2425 = scalar_lea.sflag [#allocation3], 1
    %2426 = vsyncpa %s2425, 1

</llo_original>
